<compile_context>
chip_gen: v7x
topology: tpu7x:2x2x1
jax: 0.10.0
libtpu: 0.0.40
codegen_flags: <defaults>
</compile_context>

<pallas_src>
import functools

import jax
import jax.numpy as jnp
import numpy as np
from jax.experimental import pallas as pl
from jax.experimental.pallas import tpu as pltpu


def _additive_attn_kernel(q_ref, kpt_ref, v_ref, wqt_ref, bq_ref, vw_ref,
                          out_ref, attn_ref=None, *,
                          hidden, slab_dtype, recip_approx):
    tq = q_ref.shape[1]
    lk = kpt_ref.shape[2]

    # Query projection on the MXU (f32 accumulate).  Output lanes = Np
    # (128-padded); only the first `hidden` columns are ever read below.
    qp = jnp.dot(q_ref[0], wqt_ref[...], preferred_element_type=jnp.float32)
    qp = (qp + bq_ref[...]).astype(slab_dtype)           # (TQ, Np)

    kpt = kpt_ref[0].astype(slab_dtype)                  # (H, Lk), Lk on lanes
    vw = vw_ref[...]                                     # (1, H), f32

    # scores[t, l] = sum_h vw[h] * tanh(qp[t, h] + kpT[h, l])
    # Per-h formulation: every intermediate is a 2-D, lane-dense (TQ, Lk) tile,
    # the accumulator is f32, and no (TQ, H, Lk) slab (or f32 upcast of it) is
    # ever materialized in VMEM.  Statically unrolled over the true H only
    # (padded H columns carry vw == 0 and are simply skipped).
    scores = jnp.zeros((tq, lk), jnp.float32)
    for h in range(hidden):
        th = jnp.tanh(qp[:, h:h + 1] + kpt[h:h + 1, :])  # (TQ, Lk), slab_dtype
        scores = scores + vw[:, h:h + 1] * th.astype(jnp.float32)

    # Numerically stable softmax over the key axis (lanes).
    m = jnp.max(scores, axis=-1, keepdims=True)
    e = jnp.exp(scores - m)
    denom = jnp.sum(e, axis=-1, keepdims=True)
    w = e * pl.reciprocal(denom, approx=recip_approx)    # (TQ, Lk)

    if attn_ref is not None:
        attn_ref[0] = w.astype(attn_ref.dtype)

    # Final bmm: (TQ, Lk) x (Lk, Np) on the MXU, store only the true H columns.
    out = jnp.dot(w.astype(v_ref.dtype), v_ref[0],
                  preferred_element_type=jnp.float32)    # (TQ, Np)
    out_ref[0] = out[:, :hidden].astype(out_ref.dtype)


def _vmem_capacity_bytes():
    try:
        return int(pltpu.get_tpu_info().vmem_capacity_bytes)
    except Exception:
        return 64 << 20   # conservative fallback (v7x per-TensorCore VMEM)


def _tile_vmem_bytes(tq, *, H, Np, Lk, q_isz, v_isz, w_isz, slab_isz,
                     out_isz, attn_isz, with_attn):
    """Resident VMEM for one grid step (double-buffered blocks + live temps)."""
    d = 2 * tq * H * q_isz                         # query tile
    d += 2 * H * Lk * slab_isz                     # kpT block (per batch elem)
    d += 2 * Lk * Np * v_isz                       # value block
    d += 2 * (H * Np * w_isz + Np * 4 + H * 4)     # W_q^T, b_q, v_w
    d += 2 * tq * H * out_isz                      # attn_output tile
    if with_attn:
        d += 2 * tq * Lk * attn_isz                # attn_weights tile
    # live temporaries: qp (f32 + slab copy), per-h tanh/score temps, bmm acc
    d += tq * Np * (4 + slab_isz)
    d += 6 * tq * Lk * 4
    d += tq * Np * 4
    return d


def _pick_tq(Lq, est_fn, budget, sub):
    """Largest Lq tile (multiple of `sub`, divides Lq) fitting the VMEM budget."""
    cands = [t for t in range(sub, Lq + 1, sub) if Lq % t == 0]
    if not cands:
        return Lq   # full-Lq block is always a legal BlockSpec
    fitting = [t for t in cands if est_fn(t) + (4 << 20) <= budget]
    return max(fitting) if fitting else min(cands)


def additive_attention(query, key, value, params, *,
                       tq=None,
                       mxu_dtype=jnp.float32,
                       slab_dtype=jnp.float32,
                       out_dtype=None,
                       attn_dtype=jnp.float32,
                       return_weights=True,
                       recip_approx=True,
                       vmem_fraction=0.8):
    """query: (B, Lq, H); key/value: (B, Lk, H).

    Returns (attn_output, attn_weights) if return_weights else attn_output.
    Recommended dtypes: v6e/v7x -> mxu/slab bf16; v5e -> mxu bf16, slab f32.
    """
    B, Lq, H = query.shape
    _, Lk, _ = key.shape
    if out_dtype is None:
        out_dtype = query.dtype
    f32 = jnp.float32

    # 128-multiple padding only where the MXU wants it (W_q output dim / value
    # N dim).  The tanh/score loop runs over the true H, so this costs no EUP
    # or VPU work and the padded columns are never read back.
    Np = ((H + 127) // 128) * 128
    pad_n = Np - H

    # Key projection hoisted to XLA and passed transposed as (B, H, Lk): scores
    # come out lane-dense in Lk, there is no per-batch carry in the kernel, and
    # both grid axes can be "parallel".
    kpT = (jnp.einsum("oh,bkh->bok", params["W_k_w"].astype(f32),
                      key.astype(f32))
           + params["W_k_b"].astype(f32)[None, :, None]).astype(slab_dtype)

    q = query.astype(mxu_dtype)                          # (B, Lq, H), unpadded
    wq_t = params["W_q_w"].T.astype(mxu_dtype)           # (H, H) -> pad to (H, Np)
    bq = params["W_q_b"].reshape(1, H).astype(f32)
    v_in = value
    if pad_n:
        wq_t = jnp.pad(wq_t, ((0, 0), (0, pad_n)))
        bq = jnp.pad(bq, ((0, 0), (0, pad_n)))
        v_in = jnp.pad(v_in, ((0, 0), (0, 0), (0, pad_n)))
    v_in = v_in.astype(mxu_dtype)
    vw = params["v_w"].reshape(1, H).astype(f32)
    # params["v_b"] intentionally unused: constant bias cancels in softmax.

    q_isz = jnp.dtype(mxu_dtype).itemsize
    slab_isz = jnp.dtype(slab_dtype).itemsize
    out_isz = jnp.dtype(out_dtype).itemsize
    attn_isz = jnp.dtype(attn_dtype).itemsize
    sub = 16 if min(q_isz, slab_isz, out_isz, attn_isz) < 4 else 8

    capacity = _vmem_capacity_bytes()
    budget = int(capacity * vmem_fraction)
    est_fn = functools.partial(
        _tile_vmem_bytes, H=H, Np=Np, Lk=Lk, q_isz=q_isz, v_isz=q_isz,
        w_isz=q_isz, slab_isz=slab_isz, out_isz=out_isz, attn_isz=attn_isz,
        with_attn=return_weights)
    if tq is None:
        tq = _pick_tq(Lq, est_fn, budget, sub)
    assert Lq % tq == 0, (Lq, tq)
    vmem_limit = min(max(budget, est_fn(tq) + (8 << 20)), capacity)

    grid = (B, Lq // tq)

    out_shape = [jax.ShapeDtypeStruct((B, Lq, H), out_dtype)]
    out_specs = [pl.BlockSpec((1, tq, H), lambda b, i: (b, i, 0))]
    if return_weights:
        out_shape.append(jax.ShapeDtypeStruct((B, Lq, Lk), attn_dtype))
        out_specs.append(pl.BlockSpec((1, tq, Lk), lambda b, i: (b, i, 0)))

    grid_spec = pltpu.PrefetchScalarGridSpec(
        num_scalar_prefetch=0,
        grid=grid,
        in_specs=[
            pl.BlockSpec((1, tq, H), lambda b, i: (b, i, 0)),   # query tile
            pl.BlockSpec((1, H, Lk), lambda b, i: (b, 0, 0)),   # kp^T (whole)
            pl.BlockSpec((1, Lk, Np), lambda b, i: (b, 0, 0)),  # value (whole)
            pl.BlockSpec((H, Np), lambda b, i: (0, 0)),         # W_q^T
            pl.BlockSpec((1, Np), lambda b, i: (0, 0)),         # b_q
            pl.BlockSpec((1, H), lambda b, i: (0, 0)),          # v weight row
        ],
        out_specs=out_specs,
    )

    kernel = functools.partial(_additive_attn_kernel, hidden=H,
                               slab_dtype=slab_dtype, recip_approx=recip_approx)

    bytes_accessed = (B * Lq * H * q_isz + B * H * Lk * slab_isz
                      + B * Lk * Np * q_isz + H * Np * q_isz + Np * 4 + H * 4
                      + B * Lq * H * out_isz
                      + (B * Lq * Lk * attn_isz if return_weights else 0))
    cost = pl.CostEstimate(
        flops=2 * B * Lq * H * Np + 2 * B * Lq * Lk * Np + 3 * B * Lq * Lk * H,
        transcendentals=B * Lq * Lk * (H + 1),
        bytes_accessed=bytes_accessed)

    outs = pl.pallas_call(
        kernel,
        out_shape=tuple(out_shape),
        grid_spec=grid_spec,
        compiler_params=pltpu.CompilerParams(
            dimension_semantics=("parallel", "parallel"),
            vmem_limit_bytes=int(vmem_limit)),
        cost_estimate=cost,
    )(q, kpT, v_in, wq_t, bq, vw)

    if return_weights:
        return outs[0], outs[1]
    return outs[0]


def _reference(query, key, value, params):
    qp = query @ params["W_q_w"].T + params["W_q_b"]            # (B, Lq, H)
    kp = key @ params["W_k_w"].T + params["W_k_b"]              # (B, Lk, H)
    s = jnp.tanh(qp[:, :, None, :] + kp[:, None, :, :])         # (B, Lq, Lk, H)
    scores = jnp.einsum("bqkh,h->bqk", s, params["v_w"][0]) + params["v_b"][0]
    w = jax.nn.softmax(scores, axis=-1)
    out = jnp.einsum("bqk,bkh->bqh", w, value)
    return out, w


if __name__ == "__main__":
    B, Lq, Lk, H = 2, 8, 8, 32

    key0 = jax.random.PRNGKey(0)
    ks = jax.random.split(key0, 9)

    params = {
        "W_q_w": jax.random.normal(ks[0], (H, H), jnp.float32) * 0.1,
        "W_q_b": jax.random.normal(ks[1], (H,), jnp.float32) * 0.1,
        "W_k_w": jax.random.normal(ks[2], (H, H), jnp.float32) * 0.1,
        "W_k_b": jax.random.normal(ks[3], (H,), jnp.float32) * 0.1,
        "v_w": jax.random.normal(ks[4], (1, H), jnp.float32) * 0.1,
        "v_b": jax.random.normal(ks[5], (1,), jnp.float32) * 0.1,
    }

    query = jax.random.normal(ks[6], (B, Lq, H), jnp.float32)
    key = jax.random.normal(ks[7], (B, Lk, H), jnp.float32)
    value = jax.random.normal(ks[8], (B, Lk, H), jnp.float32)

    ref_out, ref_w = _reference(query, key, value, params)

    # Full-precision path with exact softmax reciprocal (strict check).
    attn_out, attn_w = additive_attention(query, key, value, params,
                                          recip_approx=False)
    attn_out = jax.block_until_ready(attn_out)
    attn_w = jax.block_until_ready(attn_w)
    np.testing.assert_allclose(np.asarray(attn_out), np.asarray(ref_out),
                               rtol=1e-5, atol=1e-5)
    np.testing.assert_allclose(np.asarray(attn_w), np.asarray(ref_w),
                               rtol=1e-5, atol=1e-5)

    # bf16 MXU + bf16 tanh path with approx reciprocal and bf16 outputs
    # (recommended on v6e/v7x; on v5e keep slab_dtype=f32).
    attn_out_bf, attn_w_bf = additive_attention(
        query, key, value, params,
        mxu_dtype=jnp.bfloat16, slab_dtype=jnp.bfloat16,
        out_dtype=jnp.bfloat16, attn_dtype=jnp.bfloat16)
    attn_out_bf = jax.block_until_ready(attn_out_bf)
    attn_w_bf = jax.block_until_ready(attn_w_bf)
    np.testing.assert_allclose(np.asarray(attn_out_bf, dtype=np.float32),
                               np.asarray(ref_out), rtol=3e-2, atol=3e-2)
    np.testing.assert_allclose(np.asarray(attn_w_bf, dtype=np.float32),
                               np.asarray(ref_w), rtol=3e-2, atol=3e-2)

    # attn_output-only path (skips the (B, Lq, Lk) weights HBM writeback).
    out_only = additive_attention(query, key, value, params,
                                  return_weights=False, recip_approx=False)
    out_only = jax.block_until_ready(out_only)
    np.testing.assert_allclose(np.asarray(out_only), np.asarray(ref_out),
                               rtol=1e-5, atol=1e-5)

    print("KERNEL_OK")
</pallas_src>

<mosaic_0001>
module attributes {stable_mosaic.version = 11 : i64} {
  func.func @_additive_attn_kernel(%arg0: i32, %arg1: i32, %arg2: memref<1x8x32xf32, #tpu.memory_space<vmem>>, %arg3: memref<1x32x8xf32, #tpu.memory_space<vmem>>, %arg4: memref<1x8x128xf32, #tpu.memory_space<vmem>>, %arg5: memref<32x128xf32, #tpu.memory_space<vmem>>, %arg6: memref<1x128xf32, #tpu.memory_space<vmem>>, %arg7: memref<1x32xf32, #tpu.memory_space<vmem>>, %arg8: memref<1x8x32xf32, #tpu.memory_space<vmem>>, %arg9: memref<1x8x8xf32, #tpu.memory_space<vmem>>) attributes {dimension_semantics = [#tpu.dimension_semantics<parallel>, #tpu.dimension_semantics<parallel>], iteration_bounds = array<i64: 2, 1>, scalar_prefetch = 0 : i64, scratch_operands = 0 : i64, tpu.core_type = #tpu.core_type<tc>, window_params = [{transform_indices = @transform_0, window_bounds = array<i64: 1, 8, 32>}, {transform_indices = @transform_1, window_bounds = array<i64: 1, 32, 8>}, {transform_indices = @transform_2, window_bounds = array<i64: 1, 8, 128>}, {pipeline_mode = #tpu.pipeline_mode<synchronous>, transform_indices = @transform_3, window_bounds = array<i64: 32, 128>}, {pipeline_mode = #tpu.pipeline_mode<synchronous>, transform_indices = @transform_4, window_bounds = array<i64: 1, 128>}, {pipeline_mode = #tpu.pipeline_mode<synchronous>, transform_indices = @transform_5, window_bounds = array<i64: 1, 32>}, {transform_indices = @transform_6, window_bounds = array<i64: 1, 8, 32>}, {transform_indices = @transform_7, window_bounds = array<i64: 1, 8, 8>}]} {
    %c0 = arith.constant 0 : index
    %c0_0 = arith.constant 0 : index
    %c0_1 = arith.constant 0 : index
    %0 = vector.load %arg2[%c0, %c0_0, %c0_1] : memref<1x8x32xf32, #tpu.memory_space<vmem>>, vector<1x8x32xf32>
    %1 = vector.shape_cast %0 : vector<1x8x32xf32> to vector<8x32xf32>
    %c0_2 = arith.constant 0 : index
    %c0_3 = arith.constant 0 : index
    %2 = vector.load %arg5[%c0_2, %c0_3] : memref<32x128xf32, #tpu.memory_space<vmem>>, vector<32x128xf32>
    %cst = arith.constant dense<0.000000e+00> : vector<8x128xf32>
    %3 = tpu.matmul %1, %2, %cst {dimension_numbers = #tpu.dot_dimension_numbers<[1], [0], [0], [1], [0, 0, 1, 1], [], []>} : vector<8x32xf32>, vector<32x128xf32>, vector<8x128xf32> -> vector<8x128xf32>
    %c0_4 = arith.constant 0 : index
    %c0_5 = arith.constant 0 : index
    %4 = vector.load %arg6[%c0_4, %c0_5] : memref<1x128xf32, #tpu.memory_space<vmem>>, vector<1x128xf32>
    %5 = vector.broadcast %4 : vector<1x128xf32> to vector<8x128xf32>
    %6 = arith.addf %3, %5 : vector<8x128xf32>
    %c0_6 = arith.constant 0 : index
    %c0_7 = arith.constant 0 : index
    %c0_8 = arith.constant 0 : index
    %7 = vector.load %arg3[%c0_6, %c0_7, %c0_8] : memref<1x32x8xf32, #tpu.memory_space<vmem>>, vector<1x32x8xf32>
    %8 = vector.shape_cast %7 : vector<1x32x8xf32> to vector<32x8xf32>
    %c0_9 = arith.constant 0 : index
    %c0_10 = arith.constant 0 : index
    %9 = vector.load %arg7[%c0_9, %c0_10] : memref<1x32xf32, #tpu.memory_space<vmem>>, vector<1x32xf32>
    %cst_11 = arith.constant 0.000000e+00 : f32
    %10 = vector.broadcast %cst_11 : f32 to vector<8x8xf32>
    %11 = vector.extract_strided_slice %6 {offsets = [0, 0], sizes = [8, 1], strides = [1, 1]} : vector<8x128xf32> to vector<8x1xf32>
    %12 = vector.extract_strided_slice %8 {offsets = [0, 0], sizes = [1, 8], strides = [1, 1]} : vector<32x8xf32> to vector<1x8xf32>
    %13 = vector.broadcast %11 : vector<8x1xf32> to vector<8x8xf32>
    %14 = vector.broadcast %12 : vector<1x8xf32> to vector<8x8xf32>
    %15 = arith.addf %13, %14 : vector<8x8xf32>
    %16 = math.tanh %15 : vector<8x8xf32>
    %17 = vector.extract_strided_slice %9 {offsets = [0, 0], sizes = [1, 1], strides = [1, 1]} : vector<1x32xf32> to vector<1x1xf32>
    %18 = vector.broadcast %17 : vector<1x1xf32> to vector<8x8xf32>
    %19 = arith.mulf %18, %16 : vector<8x8xf32>
    %20 = arith.addf %10, %19 : vector<8x8xf32>
    %21 = vector.extract_strided_slice %6 {offsets = [0, 1], sizes = [8, 1], strides = [1, 1]} : vector<8x128xf32> to vector<8x1xf32>
    %22 = vector.extract_strided_slice %8 {offsets = [1, 0], sizes = [1, 8], strides = [1, 1]} : vector<32x8xf32> to vector<1x8xf32>
    %23 = vector.broadcast %21 : vector<8x1xf32> to vector<8x8xf32>
    %24 = vector.broadcast %22 : vector<1x8xf32> to vector<8x8xf32>
    %25 = arith.addf %23, %24 : vector<8x8xf32>
    %26 = math.tanh %25 : vector<8x8xf32>
    %27 = vector.extract_strided_slice %9 {offsets = [0, 1], sizes = [1, 1], strides = [1, 1]} : vector<1x32xf32> to vector<1x1xf32>
    %28 = vector.broadcast %27 : vector<1x1xf32> to vector<8x8xf32>
    %29 = arith.mulf %28, %26 : vector<8x8xf32>
    %30 = arith.addf %20, %29 : vector<8x8xf32>
    %31 = vector.extract_strided_slice %6 {offsets = [0, 2], sizes = [8, 1], strides = [1, 1]} : vector<8x128xf32> to vector<8x1xf32>
    %32 = vector.extract_strided_slice %8 {offsets = [2, 0], sizes = [1, 8], strides = [1, 1]} : vector<32x8xf32> to vector<1x8xf32>
    %33 = vector.broadcast %31 : vector<8x1xf32> to vector<8x8xf32>
    %34 = vector.broadcast %32 : vector<1x8xf32> to vector<8x8xf32>
    %35 = arith.addf %33, %34 : vector<8x8xf32>
    %36 = math.tanh %35 : vector<8x8xf32>
    %37 = vector.extract_strided_slice %9 {offsets = [0, 2], sizes = [1, 1], strides = [1, 1]} : vector<1x32xf32> to vector<1x1xf32>
    %38 = vector.broadcast %37 : vector<1x1xf32> to vector<8x8xf32>
    %39 = arith.mulf %38, %36 : vector<8x8xf32>
    %40 = arith.addf %30, %39 : vector<8x8xf32>
    %41 = vector.extract_strided_slice %6 {offsets = [0, 3], sizes = [8, 1], strides = [1, 1]} : vector<8x128xf32> to vector<8x1xf32>
    %42 = vector.extract_strided_slice %8 {offsets = [3, 0], sizes = [1, 8], strides = [1, 1]} : vector<32x8xf32> to vector<1x8xf32>
    %43 = vector.broadcast %41 : vector<8x1xf32> to vector<8x8xf32>
    %44 = vector.broadcast %42 : vector<1x8xf32> to vector<8x8xf32>
    %45 = arith.addf %43, %44 : vector<8x8xf32>
    %46 = math.tanh %45 : vector<8x8xf32>
    %47 = vector.extract_strided_slice %9 {offsets = [0, 3], sizes = [1, 1], strides = [1, 1]} : vector<1x32xf32> to vector<1x1xf32>
    %48 = vector.broadcast %47 : vector<1x1xf32> to vector<8x8xf32>
    %49 = arith.mulf %48, %46 : vector<8x8xf32>
    %50 = arith.addf %40, %49 : vector<8x8xf32>
    %51 = vector.extract_strided_slice %6 {offsets = [0, 4], sizes = [8, 1], strides = [1, 1]} : vector<8x128xf32> to vector<8x1xf32>
    %52 = vector.extract_strided_slice %8 {offsets = [4, 0], sizes = [1, 8], strides = [1, 1]} : vector<32x8xf32> to vector<1x8xf32>
    %53 = vector.broadcast %51 : vector<8x1xf32> to vector<8x8xf32>
    %54 = vector.broadcast %52 : vector<1x8xf32> to vector<8x8xf32>
    %55 = arith.addf %53, %54 : vector<8x8xf32>
    %56 = math.tanh %55 : vector<8x8xf32>
    %57 = vector.extract_strided_slice %9 {offsets = [0, 4], sizes = [1, 1], strides = [1, 1]} : vector<1x32xf32> to vector<1x1xf32>
    %58 = vector.broadcast %57 : vector<1x1xf32> to vector<8x8xf32>
    %59 = arith.mulf %58, %56 : vector<8x8xf32>
    %60 = arith.addf %50, %59 : vector<8x8xf32>
    %61 = vector.extract_strided_slice %6 {offsets = [0, 5], sizes = [8, 1], strides = [1, 1]} : vector<8x128xf32> to vector<8x1xf32>
    %62 = vector.extract_strided_slice %8 {offsets = [5, 0], sizes = [1, 8], strides = [1, 1]} : vector<32x8xf32> to vector<1x8xf32>
    %63 = vector.broadcast %61 : vector<8x1xf32> to vector<8x8xf32>
    %64 = vector.broadcast %62 : vector<1x8xf32> to vector<8x8xf32>
    %65 = arith.addf %63, %64 : vector<8x8xf32>
    %66 = math.tanh %65 : vector<8x8xf32>
    %67 = vector.extract_strided_slice %9 {offsets = [0, 5], sizes = [1, 1], strides = [1, 1]} : vector<1x32xf32> to vector<1x1xf32>
    %68 = vector.broadcast %67 : vector<1x1xf32> to vector<8x8xf32>
    %69 = arith.mulf %68, %66 : vector<8x8xf32>
    %70 = arith.addf %60, %69 : vector<8x8xf32>
    %71 = vector.extract_strided_slice %6 {offsets = [0, 6], sizes = [8, 1], strides = [1, 1]} : vector<8x128xf32> to vector<8x1xf32>
    %72 = vector.extract_strided_slice %8 {offsets = [6, 0], sizes = [1, 8], strides = [1, 1]} : vector<32x8xf32> to vector<1x8xf32>
    %73 = vector.broadcast %71 : vector<8x1xf32> to vector<8x8xf32>
    %74 = vector.broadcast %72 : vector<1x8xf32> to vector<8x8xf32>
    %75 = arith.addf %73, %74 : vector<8x8xf32>
    %76 = math.tanh %75 : vector<8x8xf32>
    %77 = vector.extract_strided_slice %9 {offsets = [0, 6], sizes = [1, 1], strides = [1, 1]} : vector<1x32xf32> to vector<1x1xf32>
    %78 = vector.broadcast %77 : vector<1x1xf32> to vector<8x8xf32>
    %79 = arith.mulf %78, %76 : vector<8x8xf32>
    %80 = arith.addf %70, %79 : vector<8x8xf32>
    %81 = vector.extract_strided_slice %6 {offsets = [0, 7], sizes = [8, 1], strides = [1, 1]} : vector<8x128xf32> to vector<8x1xf32>
    %82 = vector.extract_strided_slice %8 {offsets = [7, 0], sizes = [1, 8], strides = [1, 1]} : vector<32x8xf32> to vector<1x8xf32>
    %83 = vector.broadcast %81 : vector<8x1xf32> to vector<8x8xf32>
    %84 = vector.broadcast %82 : vector<1x8xf32> to vector<8x8xf32>
    %85 = arith.addf %83, %84 : vector<8x8xf32>
    %86 = math.tanh %85 : vector<8x8xf32>
    %87 = vector.extract_strided_slice %9 {offsets = [0, 7], sizes = [1, 1], strides = [1, 1]} : vector<1x32xf32> to vector<1x1xf32>
    %88 = vector.broadcast %87 : vector<1x1xf32> to vector<8x8xf32>
    %89 = arith.mulf %88, %86 : vector<8x8xf32>
    %90 = arith.addf %80, %89 : vector<8x8xf32>
    %91 = vector.extract_strided_slice %6 {offsets = [0, 8], sizes = [8, 1], strides = [1, 1]} : vector<8x128xf32> to vector<8x1xf32>
    %92 = vector.extract_strided_slice %8 {offsets = [8, 0], sizes = [1, 8], strides = [1, 1]} : vector<32x8xf32> to vector<1x8xf32>
    %93 = vector.broadcast %91 : vector<8x1xf32> to vector<8x8xf32>
    %94 = vector.broadcast %92 : vector<1x8xf32> to vector<8x8xf32>
    %95 = arith.addf %93, %94 : vector<8x8xf32>
    %96 = math.tanh %95 : vector<8x8xf32>
    %97 = vector.extract_strided_slice %9 {offsets = [0, 8], sizes = [1, 1], strides = [1, 1]} : vector<1x32xf32> to vector<1x1xf32>
    %98 = vector.broadcast %97 : vector<1x1xf32> to vector<8x8xf32>
    %99 = arith.mulf %98, %96 : vector<8x8xf32>
    %100 = arith.addf %90, %99 : vector<8x8xf32>
    %101 = vector.extract_strided_slice %6 {offsets = [0, 9], sizes = [8, 1], strides = [1, 1]} : vector<8x128xf32> to vector<8x1xf32>
    %102 = vector.extract_strided_slice %8 {offsets = [9, 0], sizes = [1, 8], strides = [1, 1]} : vector<32x8xf32> to vector<1x8xf32>
    %103 = vector.broadcast %101 : vector<8x1xf32> to vector<8x8xf32>
    %104 = vector.broadcast %102 : vector<1x8xf32> to vector<8x8xf32>
    %105 = arith.addf %103, %104 : vector<8x8xf32>
    %106 = math.tanh %105 : vector<8x8xf32>
    %107 = vector.extract_strided_slice %9 {offsets = [0, 9], sizes = [1, 1], strides = [1, 1]} : vector<1x32xf32> to vector<1x1xf32>
    %108 = vector.broadcast %107 : vector<1x1xf32> to vector<8x8xf32>
    %109 = arith.mulf %108, %106 : vector<8x8xf32>
    %110 = arith.addf %100, %109 : vector<8x8xf32>
    %111 = vector.extract_strided_slice %6 {offsets = [0, 10], sizes = [8, 1], strides = [1, 1]} : vector<8x128xf32> to vector<8x1xf32>
    %112 = vector.extract_strided_slice %8 {offsets = [10, 0], sizes = [1, 8], strides = [1, 1]} : vector<32x8xf32> to vector<1x8xf32>
    %113 = vector.broadcast %111 : vector<8x1xf32> to vector<8x8xf32>
    %114 = vector.broadcast %112 : vector<1x8xf32> to vector<8x8xf32>
    %115 = arith.addf %113, %114 : vector<8x8xf32>
    %116 = math.tanh %115 : vector<8x8xf32>
    %117 = vector.extract_strided_slice %9 {offsets = [0, 10], sizes = [1, 1], strides = [1, 1]} : vector<1x32xf32> to vector<1x1xf32>
    %118 = vector.broadcast %117 : vector<1x1xf32> to vector<8x8xf32>
    %119 = arith.mulf %118, %116 : vector<8x8xf32>
    %120 = arith.addf %110, %119 : vector<8x8xf32>
    %121 = vector.extract_strided_slice %6 {offsets = [0, 11], sizes = [8, 1], strides = [1, 1]} : vector<8x128xf32> to vector<8x1xf32>
    %122 = vector.extract_strided_slice %8 {offsets = [11, 0], sizes = [1, 8], strides = [1, 1]} : vector<32x8xf32> to vector<1x8xf32>
    %123 = vector.broadcast %121 : vector<8x1xf32> to vector<8x8xf32>
    %124 = vector.broadcast %122 : vector<1x8xf32> to vector<8x8xf32>
    %125 = arith.addf %123, %124 : vector<8x8xf32>
    %126 = math.tanh %125 : vector<8x8xf32>
    %127 = vector.extract_strided_slice %9 {offsets = [0, 11], sizes = [1, 1], strides = [1, 1]} : vector<1x32xf32> to vector<1x1xf32>
    %128 = vector.broadcast %127 : vector<1x1xf32> to vector<8x8xf32>
    %129 = arith.mulf %128, %126 : vector<8x8xf32>
    %130 = arith.addf %120, %129 : vector<8x8xf32>
    %131 = vector.extract_strided_slice %6 {offsets = [0, 12], sizes = [8, 1], strides = [1, 1]} : vector<8x128xf32> to vector<8x1xf32>
    %132 = vector.extract_strided_slice %8 {offsets = [12, 0], sizes = [1, 8], strides = [1, 1]} : vector<32x8xf32> to vector<1x8xf32>
    %133 = vector.broadcast %131 : vector<8x1xf32> to vector<8x8xf32>
    %134 = vector.broadcast %132 : vector<1x8xf32> to vector<8x8xf32>
    %135 = arith.addf %133, %134 : vector<8x8xf32>
    %136 = math.tanh %135 : vector<8x8xf32>
    %137 = vector.extract_strided_slice %9 {offsets = [0, 12], sizes = [1, 1], strides = [1, 1]} : vector<1x32xf32> to vector<1x1xf32>
    %138 = vector.broadcast %137 : vector<1x1xf32> to vector<8x8xf32>
    %139 = arith.mulf %138, %136 : vector<8x8xf32>
    %140 = arith.addf %130, %139 : vector<8x8xf32>
    %141 = vector.extract_strided_slice %6 {offsets = [0, 13], sizes = [8, 1], strides = [1, 1]} : vector<8x128xf32> to vector<8x1xf32>
    %142 = vector.extract_strided_slice %8 {offsets = [13, 0], sizes = [1, 8], strides = [1, 1]} : vector<32x8xf32> to vector<1x8xf32>
    %143 = vector.broadcast %141 : vector<8x1xf32> to vector<8x8xf32>
    %144 = vector.broadcast %142 : vector<1x8xf32> to vector<8x8xf32>
    %145 = arith.addf %143, %144 : vector<8x8xf32>
    %146 = math.tanh %145 : vector<8x8xf32>
    %147 = vector.extract_strided_slice %9 {offsets = [0, 13], sizes = [1, 1], strides = [1, 1]} : vector<1x32xf32> to vector<1x1xf32>
    %148 = vector.broadcast %147 : vector<1x1xf32> to vector<8x8xf32>
    %149 = arith.mulf %148, %146 : vector<8x8xf32>
    %150 = arith.addf %140, %149 : vector<8x8xf32>
    %151 = vector.extract_strided_slice %6 {offsets = [0, 14], sizes = [8, 1], strides = [1, 1]} : vector<8x128xf32> to vector<8x1xf32>
    %152 = vector.extract_strided_slice %8 {offsets = [14, 0], sizes = [1, 8], strides = [1, 1]} : vector<32x8xf32> to vector<1x8xf32>
    %153 = vector.broadcast %151 : vector<8x1xf32> to vector<8x8xf32>
    %154 = vector.broadcast %152 : vector<1x8xf32> to vector<8x8xf32>
    %155 = arith.addf %153, %154 : vector<8x8xf32>
    %156 = math.tanh %155 : vector<8x8xf32>
    %157 = vector.extract_strided_slice %9 {offsets = [0, 14], sizes = [1, 1], strides = [1, 1]} : vector<1x32xf32> to vector<1x1xf32>
    %158 = vector.broadcast %157 : vector<1x1xf32> to vector<8x8xf32>
    %159 = arith.mulf %158, %156 : vector<8x8xf32>
    %160 = arith.addf %150, %159 : vector<8x8xf32>
    %161 = vector.extract_strided_slice %6 {offsets = [0, 15], sizes = [8, 1], strides = [1, 1]} : vector<8x128xf32> to vector<8x1xf32>
    %162 = vector.extract_strided_slice %8 {offsets = [15, 0], sizes = [1, 8], strides = [1, 1]} : vector<32x8xf32> to vector<1x8xf32>
    %163 = vector.broadcast %161 : vector<8x1xf32> to vector<8x8xf32>
    %164 = vector.broadcast %162 : vector<1x8xf32> to vector<8x8xf32>
    %165 = arith.addf %163, %164 : vector<8x8xf32>
    %166 = math.tanh %165 : vector<8x8xf32>
    %167 = vector.extract_strided_slice %9 {offsets = [0, 15], sizes = [1, 1], strides = [1, 1]} : vector<1x32xf32> to vector<1x1xf32>
    %168 = vector.broadcast %167 : vector<1x1xf32> to vector<8x8xf32>
    %169 = arith.mulf %168, %166 : vector<8x8xf32>
    %170 = arith.addf %160, %169 : vector<8x8xf32>
    %171 = vector.extract_strided_slice %6 {offsets = [0, 16], sizes = [8, 1], strides = [1, 1]} : vector<8x128xf32> to vector<8x1xf32>
    %172 = vector.extract_strided_slice %8 {offsets = [16, 0], sizes = [1, 8], strides = [1, 1]} : vector<32x8xf32> to vector<1x8xf32>
    %173 = vector.broadcast %171 : vector<8x1xf32> to vector<8x8xf32>
    %174 = vector.broadcast %172 : vector<1x8xf32> to vector<8x8xf32>
    %175 = arith.addf %173, %174 : vector<8x8xf32>
    %176 = math.tanh %175 : vector<8x8xf32>
    %177 = vector.extract_strided_slice %9 {offsets = [0, 16], sizes = [1, 1], strides = [1, 1]} : vector<1x32xf32> to vector<1x1xf32>
    %178 = vector.broadcast %177 : vector<1x1xf32> to vector<8x8xf32>
    %179 = arith.mulf %178, %176 : vector<8x8xf32>
    %180 = arith.addf %170, %179 : vector<8x8xf32>
    %181 = vector.extract_strided_slice %6 {offsets = [0, 17], sizes = [8, 1], strides = [1, 1]} : vector<8x128xf32> to vector<8x1xf32>
    %182 = vector.extract_strided_slice %8 {offsets = [17, 0], sizes = [1, 8], strides = [1, 1]} : vector<32x8xf32> to vector<1x8xf32>
    %183 = vector.broadcast %181 : vector<8x1xf32> to vector<8x8xf32>
    %184 = vector.broadcast %182 : vector<1x8xf32> to vector<8x8xf32>
    %185 = arith.addf %183, %184 : vector<8x8xf32>
    %186 = math.tanh %185 : vector<8x8xf32>
    %187 = vector.extract_strided_slice %9 {offsets = [0, 17], sizes = [1, 1], strides = [1, 1]} : vector<1x32xf32> to vector<1x1xf32>
    %188 = vector.broadcast %187 : vector<1x1xf32> to vector<8x8xf32>
    %189 = arith.mulf %188, %186 : vector<8x8xf32>
    %190 = arith.addf %180, %189 : vector<8x8xf32>
    %191 = vector.extract_strided_slice %6 {offsets = [0, 18], sizes = [8, 1], strides = [1, 1]} : vector<8x128xf32> to vector<8x1xf32>
    %192 = vector.extract_strided_slice %8 {offsets = [18, 0], sizes = [1, 8], strides = [1, 1]} : vector<32x8xf32> to vector<1x8xf32>
    %193 = vector.broadcast %191 : vector<8x1xf32> to vector<8x8xf32>
    %194 = vector.broadcast %192 : vector<1x8xf32> to vector<8x8xf32>
    %195 = arith.addf %193, %194 : vector<8x8xf32>
    %196 = math.tanh %195 : vector<8x8xf32>
    %197 = vector.extract_strided_slice %9 {offsets = [0, 18], sizes = [1, 1], strides = [1, 1]} : vector<1x32xf32> to vector<1x1xf32>
    %198 = vector.broadcast %197 : vector<1x1xf32> to vector<8x8xf32>
    %199 = arith.mulf %198, %196 : vector<8x8xf32>
    %200 = arith.addf %190, %199 : vector<8x8xf32>
    %201 = vector.extract_strided_slice %6 {offsets = [0, 19], sizes = [8, 1], strides = [1, 1]} : vector<8x128xf32> to vector<8x1xf32>
    %202 = vector.extract_strided_slice %8 {offsets = [19, 0], sizes = [1, 8], strides = [1, 1]} : vector<32x8xf32> to vector<1x8xf32>
    %203 = vector.broadcast %201 : vector<8x1xf32> to vector<8x8xf32>
    %204 = vector.broadcast %202 : vector<1x8xf32> to vector<8x8xf32>
    %205 = arith.addf %203, %204 : vector<8x8xf32>
    %206 = math.tanh %205 : vector<8x8xf32>
    %207 = vector.extract_strided_slice %9 {offsets = [0, 19], sizes = [1, 1], strides = [1, 1]} : vector<1x32xf32> to vector<1x1xf32>
    %208 = vector.broadcast %207 : vector<1x1xf32> to vector<8x8xf32>
    %209 = arith.mulf %208, %206 : vector<8x8xf32>
    %210 = arith.addf %200, %209 : vector<8x8xf32>
    %211 = vector.extract_strided_slice %6 {offsets = [0, 20], sizes = [8, 1], strides = [1, 1]} : vector<8x128xf32> to vector<8x1xf32>
    %212 = vector.extract_strided_slice %8 {offsets = [20, 0], sizes = [1, 8], strides = [1, 1]} : vector<32x8xf32> to vector<1x8xf32>
    %213 = vector.broadcast %211 : vector<8x1xf32> to vector<8x8xf32>
    %214 = vector.broadcast %212 : vector<1x8xf32> to vector<8x8xf32>
    %215 = arith.addf %213, %214 : vector<8x8xf32>
    %216 = math.tanh %215 : vector<8x8xf32>
    %217 = vector.extract_strided_slice %9 {offsets = [0, 20], sizes = [1, 1], strides = [1, 1]} : vector<1x32xf32> to vector<1x1xf32>
    %218 = vector.broadcast %217 : vector<1x1xf32> to vector<8x8xf32>
    %219 = arith.mulf %218, %216 : vector<8x8xf32>
    %220 = arith.addf %210, %219 : vector<8x8xf32>
    %221 = vector.extract_strided_slice %6 {offsets = [0, 21], sizes = [8, 1], strides = [1, 1]} : vector<8x128xf32> to vector<8x1xf32>
    %222 = vector.extract_strided_slice %8 {offsets = [21, 0], sizes = [1, 8], strides = [1, 1]} : vector<32x8xf32> to vector<1x8xf32>
    %223 = vector.broadcast %221 : vector<8x1xf32> to vector<8x8xf32>
    %224 = vector.broadcast %222 : vector<1x8xf32> to vector<8x8xf32>
    %225 = arith.addf %223, %224 : vector<8x8xf32>
    %226 = math.tanh %225 : vector<8x8xf32>
    %227 = vector.extract_strided_slice %9 {offsets = [0, 21], sizes = [1, 1], strides = [1, 1]} : vector<1x32xf32> to vector<1x1xf32>
    %228 = vector.broadcast %227 : vector<1x1xf32> to vector<8x8xf32>
    %229 = arith.mulf %228, %226 : vector<8x8xf32>
    %230 = arith.addf %220, %229 : vector<8x8xf32>
    %231 = vector.extract_strided_slice %6 {offsets = [0, 22], sizes = [8, 1], strides = [1, 1]} : vector<8x128xf32> to vector<8x1xf32>
    %232 = vector.extract_strided_slice %8 {offsets = [22, 0], sizes = [1, 8], strides = [1, 1]} : vector<32x8xf32> to vector<1x8xf32>
    %233 = vector.broadcast %231 : vector<8x1xf32> to vector<8x8xf32>
    %234 = vector.broadcast %232 : vector<1x8xf32> to vector<8x8xf32>
    %235 = arith.addf %233, %234 : vector<8x8xf32>
    %236 = math.tanh %235 : vector<8x8xf32>
    %237 = vector.extract_strided_slice %9 {offsets = [0, 22], sizes = [1, 1], strides = [1, 1]} : vector<1x32xf32> to vector<1x1xf32>
    %238 = vector.broadcast %237 : vector<1x1xf32> to vector<8x8xf32>
    %239 = arith.mulf %238, %236 : vector<8x8xf32>
    %240 = arith.addf %230, %239 : vector<8x8xf32>
    %241 = vector.extract_strided_slice %6 {offsets = [0, 23], sizes = [8, 1], strides = [1, 1]} : vector<8x128xf32> to vector<8x1xf32>
    %242 = vector.extract_strided_slice %8 {offsets = [23, 0], sizes = [1, 8], strides = [1, 1]} : vector<32x8xf32> to vector<1x8xf32>
    %243 = vector.broadcast %241 : vector<8x1xf32> to vector<8x8xf32>
    %244 = vector.broadcast %242 : vector<1x8xf32> to vector<8x8xf32>
    %245 = arith.addf %243, %244 : vector<8x8xf32>
    %246 = math.tanh %245 : vector<8x8xf32>
    %247 = vector.extract_strided_slice %9 {offsets = [0, 23], sizes = [1, 1], strides = [1, 1]} : vector<1x32xf32> to vector<1x1xf32>
    %248 = vector.broadcast %247 : vector<1x1xf32> to vector<8x8xf32>
    %249 = arith.mulf %248, %246 : vector<8x8xf32>
    %250 = arith.addf %240, %249 : vector<8x8xf32>
    %251 = vector.extract_strided_slice %6 {offsets = [0, 24], sizes = [8, 1], strides = [1, 1]} : vector<8x128xf32> to vector<8x1xf32>
    %252 = vector.extract_strided_slice %8 {offsets = [24, 0], sizes = [1, 8], strides = [1, 1]} : vector<32x8xf32> to vector<1x8xf32>
    %253 = vector.broadcast %251 : vector<8x1xf32> to vector<8x8xf32>
    %254 = vector.broadcast %252 : vector<1x8xf32> to vector<8x8xf32>
    %255 = arith.addf %253, %254 : vector<8x8xf32>
    %256 = math.tanh %255 : vector<8x8xf32>
    %257 = vector.extract_strided_slice %9 {offsets = [0, 24], sizes = [1, 1], strides = [1, 1]} : vector<1x32xf32> to vector<1x1xf32>
    %258 = vector.broadcast %257 : vector<1x1xf32> to vector<8x8xf32>
    %259 = arith.mulf %258, %256 : vector<8x8xf32>
    %260 = arith.addf %250, %259 : vector<8x8xf32>
    %261 = vector.extract_strided_slice %6 {offsets = [0, 25], sizes = [8, 1], strides = [1, 1]} : vector<8x128xf32> to vector<8x1xf32>
    %262 = vector.extract_strided_slice %8 {offsets = [25, 0], sizes = [1, 8], strides = [1, 1]} : vector<32x8xf32> to vector<1x8xf32>
    %263 = vector.broadcast %261 : vector<8x1xf32> to vector<8x8xf32>
    %264 = vector.broadcast %262 : vector<1x8xf32> to vector<8x8xf32>
    %265 = arith.addf %263, %264 : vector<8x8xf32>
    %266 = math.tanh %265 : vector<8x8xf32>
    %267 = vector.extract_strided_slice %9 {offsets = [0, 25], sizes = [1, 1], strides = [1, 1]} : vector<1x32xf32> to vector<1x1xf32>
    %268 = vector.broadcast %267 : vector<1x1xf32> to vector<8x8xf32>
    %269 = arith.mulf %268, %266 : vector<8x8xf32>
    %270 = arith.addf %260, %269 : vector<8x8xf32>
    %271 = vector.extract_strided_slice %6 {offsets = [0, 26], sizes = [8, 1], strides = [1, 1]} : vector<8x128xf32> to vector<8x1xf32>
    %272 = vector.extract_strided_slice %8 {offsets = [26, 0], sizes = [1, 8], strides = [1, 1]} : vector<32x8xf32> to vector<1x8xf32>
    %273 = vector.broadcast %271 : vector<8x1xf32> to vector<8x8xf32>
    %274 = vector.broadcast %272 : vector<1x8xf32> to vector<8x8xf32>
    %275 = arith.addf %273, %274 : vector<8x8xf32>
    %276 = math.tanh %275 : vector<8x8xf32>
    %277 = vector.extract_strided_slice %9 {offsets = [0, 26], sizes = [1, 1], strides = [1, 1]} : vector<1x32xf32> to vector<1x1xf32>
    %278 = vector.broadcast %277 : vector<1x1xf32> to vector<8x8xf32>
    %279 = arith.mulf %278, %276 : vector<8x8xf32>
    %280 = arith.addf %270, %279 : vector<8x8xf32>
    %281 = vector.extract_strided_slice %6 {offsets = [0, 27], sizes = [8, 1], strides = [1, 1]} : vector<8x128xf32> to vector<8x1xf32>
    %282 = vector.extract_strided_slice %8 {offsets = [27, 0], sizes = [1, 8], strides = [1, 1]} : vector<32x8xf32> to vector<1x8xf32>
    %283 = vector.broadcast %281 : vector<8x1xf32> to vector<8x8xf32>
    %284 = vector.broadcast %282 : vector<1x8xf32> to vector<8x8xf32>
    %285 = arith.addf %283, %284 : vector<8x8xf32>
    %286 = math.tanh %285 : vector<8x8xf32>
    %287 = vector.extract_strided_slice %9 {offsets = [0, 27], sizes = [1, 1], strides = [1, 1]} : vector<1x32xf32> to vector<1x1xf32>
    %288 = vector.broadcast %287 : vector<1x1xf32> to vector<8x8xf32>
    %289 = arith.mulf %288, %286 : vector<8x8xf32>
    %290 = arith.addf %280, %289 : vector<8x8xf32>
    %291 = vector.extract_strided_slice %6 {offsets = [0, 28], sizes = [8, 1], strides = [1, 1]} : vector<8x128xf32> to vector<8x1xf32>
    %292 = vector.extract_strided_slice %8 {offsets = [28, 0], sizes = [1, 8], strides = [1, 1]} : vector<32x8xf32> to vector<1x8xf32>
    %293 = vector.broadcast %291 : vector<8x1xf32> to vector<8x8xf32>
    %294 = vector.broadcast %292 : vector<1x8xf32> to vector<8x8xf32>
    %295 = arith.addf %293, %294 : vector<8x8xf32>
    %296 = math.tanh %295 : vector<8x8xf32>
    %297 = vector.extract_strided_slice %9 {offsets = [0, 28], sizes = [1, 1], strides = [1, 1]} : vector<1x32xf32> to vector<1x1xf32>
    %298 = vector.broadcast %297 : vector<1x1xf32> to vector<8x8xf32>
    %299 = arith.mulf %298, %296 : vector<8x8xf32>
    %300 = arith.addf %290, %299 : vector<8x8xf32>
    %301 = vector.extract_strided_slice %6 {offsets = [0, 29], sizes = [8, 1], strides = [1, 1]} : vector<8x128xf32> to vector<8x1xf32>
    %302 = vector.extract_strided_slice %8 {offsets = [29, 0], sizes = [1, 8], strides = [1, 1]} : vector<32x8xf32> to vector<1x8xf32>
    %303 = vector.broadcast %301 : vector<8x1xf32> to vector<8x8xf32>
    %304 = vector.broadcast %302 : vector<1x8xf32> to vector<8x8xf32>
    %305 = arith.addf %303, %304 : vector<8x8xf32>
    %306 = math.tanh %305 : vector<8x8xf32>
    %307 = vector.extract_strided_slice %9 {offsets = [0, 29], sizes = [1, 1], strides = [1, 1]} : vector<1x32xf32> to vector<1x1xf32>
    %308 = vector.broadcast %307 : vector<1x1xf32> to vector<8x8xf32>
    %309 = arith.mulf %308, %306 : vector<8x8xf32>
    %310 = arith.addf %300, %309 : vector<8x8xf32>
    %311 = vector.extract_strided_slice %6 {offsets = [0, 30], sizes = [8, 1], strides = [1, 1]} : vector<8x128xf32> to vector<8x1xf32>
    %312 = vector.extract_strided_slice %8 {offsets = [30, 0], sizes = [1, 8], strides = [1, 1]} : vector<32x8xf32> to vector<1x8xf32>
    %313 = vector.broadcast %311 : vector<8x1xf32> to vector<8x8xf32>
    %314 = vector.broadcast %312 : vector<1x8xf32> to vector<8x8xf32>
    %315 = arith.addf %313, %314 : vector<8x8xf32>
    %316 = math.tanh %315 : vector<8x8xf32>
    %317 = vector.extract_strided_slice %9 {offsets = [0, 30], sizes = [1, 1], strides = [1, 1]} : vector<1x32xf32> to vector<1x1xf32>
    %318 = vector.broadcast %317 : vector<1x1xf32> to vector<8x8xf32>
    %319 = arith.mulf %318, %316 : vector<8x8xf32>
    %320 = arith.addf %310, %319 : vector<8x8xf32>
    %321 = vector.extract_strided_slice %6 {offsets = [0, 31], sizes = [8, 1], strides = [1, 1]} : vector<8x128xf32> to vector<8x1xf32>
    %322 = vector.extract_strided_slice %8 {offsets = [31, 0], sizes = [1, 8], strides = [1, 1]} : vector<32x8xf32> to vector<1x8xf32>
    %323 = vector.broadcast %321 : vector<8x1xf32> to vector<8x8xf32>
    %324 = vector.broadcast %322 : vector<1x8xf32> to vector<8x8xf32>
    %325 = arith.addf %323, %324 : vector<8x8xf32>
    %326 = math.tanh %325 : vector<8x8xf32>
    %327 = vector.extract_strided_slice %9 {offsets = [0, 31], sizes = [1, 1], strides = [1, 1]} : vector<1x32xf32> to vector<1x1xf32>
    %328 = vector.broadcast %327 : vector<1x1xf32> to vector<8x8xf32>
    %329 = arith.mulf %328, %326 : vector<8x8xf32>
    %330 = arith.addf %320, %329 : vector<8x8xf32>
    %cst_12 = arith.constant dense<0xFF800000> : vector<8xf32>
    %331 = vector.multi_reduction <maximumf>, %330, %cst_12 [1] : vector<8x8xf32> to vector<8xf32>
    %332 = vector.shape_cast %331 : vector<8xf32> to vector<8x1xf32>
    %333 = vector.broadcast %332 : vector<8x1xf32> to vector<8x8xf32>
    %334 = arith.subf %330, %333 : vector<8x8xf32>
    %335 = math.exp %334 : vector<8x8xf32>
    %cst_13 = arith.constant dense<0.000000e+00> : vector<8xf32>
    %336 = vector.multi_reduction <add>, %335, %cst_13 [1] : vector<8x8xf32> to vector<8xf32>
    %337 = vector.shape_cast %336 : vector<8xf32> to vector<8x1xf32>
    %338 = tpu.reciprocal %337 : vector<8x1xf32> -> vector<8x1xf32>
    %339 = vector.broadcast %338 : vector<8x1xf32> to vector<8x8xf32>
    %340 = arith.mulf %335, %339 : vector<8x8xf32>
    %c0_14 = arith.constant 0 : index
    %c0_15 = arith.constant 0 : index
    %c0_16 = arith.constant 0 : index
    %341 = vector.load %arg9[%c0_14, %c0_15, %c0_16] : memref<1x8x8xf32, #tpu.memory_space<vmem>>, vector<1x8x8xf32>
    %342 = vector.shape_cast %341 : vector<1x8x8xf32> to vector<8x8xf32>
    %343 = vector.shape_cast %340 : vector<8x8xf32> to vector<1x8x8xf32>
    tpu.vector_store %arg9[%c0_14, %c0_15, %c0_16], %343 {strides = array<i32>} : memref<1x8x8xf32, #tpu.memory_space<vmem>>, vector<1x8x8xf32>,
    %c0_17 = arith.constant 0 : index
    %c0_18 = arith.constant 0 : index
    %c0_19 = arith.constant 0 : index
    %344 = vector.load %arg4[%c0_17, %c0_18, %c0_19] : memref<1x8x128xf32, #tpu.memory_space<vmem>>, vector<1x8x128xf32>
    %345 = vector.shape_cast %344 : vector<1x8x128xf32> to vector<8x128xf32>
    %cst_20 = arith.constant dense<0.000000e+00> : vector<8x128xf32>
    %346 = tpu.matmul %340, %345, %cst_20 {dimension_numbers = #tpu.dot_dimension_numbers<[1], [0], [0], [1], [0, 0, 1, 1], [], []>} : vector<8x8xf32>, vector<8x128xf32>, vector<8x128xf32> -> vector<8x128xf32>
    %347 = vector.extract_strided_slice %346 {offsets = [0, 0], sizes = [8, 32], strides = [1, 1]} : vector<8x128xf32> to vector<8x32xf32>
    %c0_21 = arith.constant 0 : index
    %c0_22 = arith.constant 0 : index
    %c0_23 = arith.constant 0 : index
    %348 = vector.load %arg8[%c0_21, %c0_22, %c0_23] : memref<1x8x32xf32, #tpu.memory_space<vmem>>, vector<1x8x32xf32>
    %349 = vector.shape_cast %348 : vector<1x8x32xf32> to vector<8x32xf32>
    %350 = vector.shape_cast %347 : vector<8x32xf32> to vector<1x8x32xf32>
    tpu.vector_store %arg8[%c0_21, %c0_22, %c0_23], %350 {strides = array<i32>} : memref<1x8x32xf32, #tpu.memory_space<vmem>>, vector<1x8x32xf32>,
    return
  }
  func.func @transform_0(%arg0: i32, %arg1: i32) -> (i32, i32, i32) {
    %c0_i32 = arith.constant 0 : i32
    %c0_i32_0 = arith.constant 0 : i32
    return %arg0, %arg1, %c0_i32 : i32, i32, i32
  }
  func.func @transform_1(%arg0: i32, %arg1: i32) -> (i32, i32, i32) {
    %c0_i32 = arith.constant 0 : i32
    %c0_i32_0 = arith.constant 0 : i32
    %c0_i32_1 = arith.constant 0 : i32
    return %arg0, %c0_i32, %c0_i32_0 : i32, i32, i32
  }
  func.func @transform_2(%arg0: i32, %arg1: i32) -> (i32, i32, i32) {
    %c0_i32 = arith.constant 0 : i32
    %c0_i32_0 = arith.constant 0 : i32
    %c0_i32_1 = arith.constant 0 : i32
    return %arg0, %c0_i32, %c0_i32_0 : i32, i32, i32
  }
  func.func @transform_3(%arg0: i32, %arg1: i32) -> (i32, i32) {
    %c0_i32 = arith.constant 0 : i32
    %c0_i32_0 = arith.constant 0 : i32
    %c0_i32_1 = arith.constant 0 : i32
    return %c0_i32, %c0_i32_0 : i32, i32
  }
  func.func @transform_4(%arg0: i32, %arg1: i32) -> (i32, i32) {
    %c0_i32 = arith.constant 0 : i32
    %c0_i32_0 = arith.constant 0 : i32
    %c0_i32_1 = arith.constant 0 : i32
    return %c0_i32, %c0_i32_0 : i32, i32
  }
  func.func @transform_5(%arg0: i32, %arg1: i32) -> (i32, i32) {
    %c0_i32 = arith.constant 0 : i32
    %c0_i32_0 = arith.constant 0 : i32
    %c0_i32_1 = arith.constant 0 : i32
    return %c0_i32, %c0_i32_0 : i32, i32
  }
  func.func @transform_6(%arg0: i32, %arg1: i32) -> (i32, i32, i32) {
    %c0_i32 = arith.constant 0 : i32
    %c0_i32_0 = arith.constant 0 : i32
    return %arg0, %arg1, %c0_i32 : i32, i32, i32
  }
  func.func @transform_7(%arg0: i32, %arg1: i32) -> (i32, i32, i32) {
    %c0_i32 = arith.constant 0 : i32
    %c0_i32_0 = arith.constant 0 : i32
    return %arg0, %arg1, %c0_i32 : i32, i32, i32
  }
}

</mosaic_0001>

<llo_original>
// kernel: tpu_custom_call.1
$region0: #{tpu_custom_call.1}
  #allocation0 [shape = 'u32[]', space=smem, size = 0x4, offset = 0x4, fixed_abs, tag = 'smem constant byte address 0x4 - core index']
  #allocation1 [shape = 'u32[144,128]{1,0:T(1,128)}', space=vmem, size = 0x12000, scoped, tag = 'internal scratch']
  %s0 = inlined_call_operand.vmem [shape: f32[2,8,32], index: 0, kind: input, shape index: {}]
  %s1 = inlined_call_operand.vmem [shape: f32[2,32,8], index: 1, kind: input, shape index: {}]
  %s2 = inlined_call_operand.vmem [shape: f32[2,8,128], index: 2, kind: input, shape index: {}]
  %s3 = inlined_call_operand.vmem [shape: f32[32,128], index: 3, kind: input, shape index: {}]
  %s4 = inlined_call_operand.vmem [shape: f32[1,128], index: 4, kind: input, shape index: {}]
  %s5 = inlined_call_operand.vmem [shape: f32[1,32], index: 5, kind: input, shape index: {}]
  %s6 = inlined_call_operand.hbm [shape: f32[2,8,32], index: 6, kind: output, shape index: {0}]
  %s7 = inlined_call_operand.hbm [shape: f32[2,8,8], index: 7, kind: output, shape index: {1}]
  %8 = xla_tuple %s6, %s7
  %s9 = sld [smem:[#allocation0]]
  $region65: #{tpu_custom_call.1} parent=0
    _
  %s11 = ssub.s32 1, %s9
  %s12 = scalar_select 0, %s11, %s9
  $region1: #{tpu_custom_call.1} parent=0
    #allocation2 [shape = 'u8[8192]{0}', space=vmem, size = 0x2000, scoped, tag = 'output window, operand 0']
    #allocation3 [shape = 's32[2]{0}', space=sflag, size = 0x8, scoped, tag = 'scoped memory for tpu_custom_call.1']
    #allocation4 [shape = 'u8[8192]{0}', space=vmem, size = 0x2000, scoped, tag = 'output window, operand 1']
    #allocation5 [shape = 's32[2]{0}', space=sflag, size = 0x8, scoped, tag = 'scoped memory for tpu_custom_call.1']
    %13 = vsyncpa [#allocation3], 0
    %s14 = scalar_lea.sflag [#allocation3], 1
    %15 = vsyncpa %s14, 0
    %16 = vsyncpa [#allocation5], 0
    %s17 = scalar_lea.sflag [#allocation5], 1
    %18 = vsyncpa %s17, 0
    loop: start=0, step=1, limit=4
    $region2: #{tpu_custom_call.1} parent=1 // loop_pre_header
      _
    $region3: #{tpu_custom_call.1} parent=1 // loop_header
      %s20 = sphi 0, %s24
      %p21 = scmp.ge.s32.totalorder %s20, 4
      %s27 = sphi 0, %s39
      %s28 = sphi 0, %s35
      %s29 = sphi 0, %s27
      %s30 = sphi 0, %s28
      %s31 = sphi 0, %s29
      %s32 = sphi 0, %s30
      %s44 = sphi 0, %s46
      %s47 = sphi 0, %s44
      %s48 = sphi 0, %s47
      %s64 = sphi 0, %s48
      %s70 = sphi 0, %s72
      %s73 = sphi 0, %s70
      %s74 = sphi 0, %s73
      %s90 = sphi 0, %s74
      %s96 = sphi 0, %s98
      %s99 = sphi 0, %s96
      %s100 = sphi 0, %s99
      %s116 = sphi 0, %s100
      %s120 = sphi 0, %s120
      %s122 = sphi 0, %s120
      %s123 = sphi 0, %s122
      %s137 = sphi 0, %s123
      %s141 = sphi 0, %s141
      %s143 = sphi 0, %s141
      %s144 = sphi 0, %s143
      %s158 = sphi 0, %s144
      %s162 = sphi 0, %s162
      %s164 = sphi 0, %s162
      %s165 = sphi 0, %s164
      %s179 = sphi 0, %s165
      %s187 = sphi 0, %s189
      %s190 = sphi 0, %s187
      %s191 = sphi 0, %s190
      %s207 = sphi 0, %s191
      %s215 = sphi 0, %s217
      %s218 = sphi 0, %s215
      %s219 = sphi 0, %s218
      %s235 = sphi 0, %s219
    $region4: #{tpu_custom_call.1} parent=1 // loop_header_branch
      %23 = sbr.rel (%p21) target = $region8
    $region5: #{tpu_custom_call.1} parent=1 // loop_body
      %s25 = ssub.s32 %s20, 1
      %s26 = ssub.s32 %s20, 2
      %s33 = sadd.s32 1, %s28
      %p34 = scmp.ge.s32.totalorder %s33, 1
      %s35 = scalar_select %p34, 0, %s33
      %s36 = sadd.s32 1, %s27
      %s37 = scalar_select %p34, %s36, %s27
      %p38 = scmp.ge.s32.totalorder %s37, 2
      %s39 = scalar_select %p38, 0, %s37
      %s40 = ssub.s32 %s27, %s39
      %s41 = ssub.s32 %s28, %s35
      %s42 = sor.u32 %s40, %s41
      %p43 = scmp.eq.s32.totalorder %s42, 0
      %s45 = sadd.s32 %s44, 1
      %s46 = scalar_select %p43, %s44, %s45
      %p49 = pneg %p43
      %p50 = scmp.eq.s32.totalorder %s20, 1
      %p51 = por %p49, %p50
      %p52 = scmp.ne.s32.totalorder %s44, %s47
      %p53 = scmp.eq.s32.totalorder %s20, 0
      %p54 = por %p52, %p53
      %p55 = scmp.ne.s32.totalorder %s44, %s47
      %p56 = scmp.eq.s32.totalorder %s25, 1
      %p57 = por %p55, %p56
      %p58 = scmp.ne.s32.totalorder %s47, %s48
      %p59 = scmp.eq.s32.totalorder %s25, 0
      %p60 = por %p58, %p59
      %p61 = scmp.ne.s32.totalorder %s47, %s48
      %p62 = scmp.eq.s32.totalorder %s26, 1
      %p63 = por %p61, %p62
      %p65 = scmp.ne.s32.totalorder %s48, %s64
      %p66 = scmp.eq.s32.totalorder %s26, 0
      %p67 = por %p65, %p66
      %s68 = ssub.s32 %s27, %s39
      %p69 = scmp.eq.s32.totalorder %s68, 0
      %s71 = sadd.s32 %s70, 1
      %s72 = scalar_select %p69, %s70, %s71
      %p75 = pneg %p69
      %p76 = scmp.eq.s32.totalorder %s20, 1
      %p77 = por %p75, %p76
      %p78 = scmp.ne.s32.totalorder %s70, %s73
      %p79 = scmp.eq.s32.totalorder %s20, 0
      %p80 = por %p78, %p79
      %p81 = scmp.ne.s32.totalorder %s70, %s73
      %p82 = scmp.eq.s32.totalorder %s25, 1
      %p83 = por %p81, %p82
      %p84 = scmp.ne.s32.totalorder %s73, %s74
      %p85 = scmp.eq.s32.totalorder %s25, 0
      %p86 = por %p84, %p85
      %p87 = scmp.ne.s32.totalorder %s73, %s74
      %p88 = scmp.eq.s32.totalorder %s26, 1
      %p89 = por %p87, %p88
      %p91 = scmp.ne.s32.totalorder %s74, %s90
      %p92 = scmp.eq.s32.totalorder %s26, 0
      %p93 = por %p91, %p92
      %s94 = ssub.s32 %s27, %s39
      %p95 = scmp.eq.s32.totalorder %s94, 0
      %s97 = sadd.s32 %s96, 1
      %s98 = scalar_select %p95, %s96, %s97
      %p101 = pneg %p95
      %p102 = scmp.eq.s32.totalorder %s20, 1
      %p103 = por %p101, %p102
      %p104 = scmp.ne.s32.totalorder %s96, %s99
      %p105 = scmp.eq.s32.totalorder %s20, 0
      %p106 = por %p104, %p105
      %p107 = scmp.ne.s32.totalorder %s96, %s99
      %p108 = scmp.eq.s32.totalorder %s25, 1
      %p109 = por %p107, %p108
      %p110 = scmp.ne.s32.totalorder %s99, %s100
      %p111 = scmp.eq.s32.totalorder %s25, 0
      %p112 = por %p110, %p111
      %p113 = scmp.ne.s32.totalorder %s99, %s100
      %p114 = scmp.eq.s32.totalorder %s26, 1
      %p115 = por %p113, %p114
      %p117 = scmp.ne.s32.totalorder %s100, %s116
      %p118 = scmp.eq.s32.totalorder %s26, 0
      %p119 = por %p117, %p118
      %s121 = sadd.s32 %s120, 1
      %p124 = scmp.eq.s32.totalorder %s20, 1
      %p125 = scmp.ne.s32.totalorder %s120, %s122
      %p126 = scmp.eq.s32.totalorder %s20, 0
      %p127 = por %p125, %p126
      %p128 = scmp.ne.s32.totalorder %s120, %s122
      %p129 = scmp.eq.s32.totalorder %s25, 1
      %p130 = por %p128, %p129
      %p131 = scmp.ne.s32.totalorder %s122, %s123
      %p132 = scmp.eq.s32.totalorder %s25, 0
      %p133 = por %p131, %p132
      %p134 = scmp.ne.s32.totalorder %s122, %s123
      %p135 = scmp.eq.s32.totalorder %s26, 1
      %p136 = por %p134, %p135
      %p138 = scmp.ne.s32.totalorder %s123, %s137
      %p139 = scmp.eq.s32.totalorder %s26, 0
      %p140 = por %p138, %p139
      %s142 = sadd.s32 %s141, 1
      %p145 = scmp.eq.s32.totalorder %s20, 1
      %p146 = scmp.ne.s32.totalorder %s141, %s143
      %p147 = scmp.eq.s32.totalorder %s20, 0
      %p148 = por %p146, %p147
      %p149 = scmp.ne.s32.totalorder %s141, %s143
      %p150 = scmp.eq.s32.totalorder %s25, 1
      %p151 = por %p149, %p150
      %p152 = scmp.ne.s32.totalorder %s143, %s144
      %p153 = scmp.eq.s32.totalorder %s25, 0
      %p154 = por %p152, %p153
      %p155 = scmp.ne.s32.totalorder %s143, %s144
      %p156 = scmp.eq.s32.totalorder %s26, 1
      %p157 = por %p155, %p156
      %p159 = scmp.ne.s32.totalorder %s144, %s158
      %p160 = scmp.eq.s32.totalorder %s26, 0
      %p161 = por %p159, %p160
      %s163 = sadd.s32 %s162, 1
      %p166 = scmp.eq.s32.totalorder %s20, 1
      %p167 = scmp.ne.s32.totalorder %s162, %s164
      %p168 = scmp.eq.s32.totalorder %s20, 0
      %p169 = por %p167, %p168
      %p170 = scmp.ne.s32.totalorder %s162, %s164
      %p171 = scmp.eq.s32.totalorder %s25, 1
      %p172 = por %p170, %p171
      %p173 = scmp.ne.s32.totalorder %s164, %s165
      %p174 = scmp.eq.s32.totalorder %s25, 0
      %p175 = por %p173, %p174
      %p176 = scmp.ne.s32.totalorder %s164, %s165
      %p177 = scmp.eq.s32.totalorder %s26, 1
      %p178 = por %p176, %p177
      %p180 = scmp.ne.s32.totalorder %s165, %s179
      %p181 = scmp.eq.s32.totalorder %s26, 0
      %p182 = por %p180, %p181
      %s183 = ssub.s32 %s27, %s39
      %s184 = ssub.s32 %s28, %s35
      %s185 = sor.u32 %s183, %s184
      %p186 = scmp.eq.s32.totalorder %s185, 0
      %s188 = sadd.s32 %s187, 1
      %s189 = scalar_select %p186, %s187, %s188
      %p192 = pneg %p186
      %p193 = scmp.eq.s32.totalorder %s20, 1
      %p194 = por %p192, %p193
      %p195 = scmp.ne.s32.totalorder %s187, %s190
      %p196 = scmp.eq.s32.totalorder %s20, 0
      %p197 = por %p195, %p196
      %p198 = scmp.ne.s32.totalorder %s187, %s190
      %p199 = scmp.eq.s32.totalorder %s25, 1
      %p200 = por %p198, %p199
      %p201 = scmp.ne.s32.totalorder %s190, %s191
      %p202 = scmp.eq.s32.totalorder %s25, 0
      %p203 = por %p201, %p202
      %p204 = scmp.ne.s32.totalorder %s190, %s191
      %p205 = scmp.eq.s32.totalorder %s26, 1
      %p206 = por %p204, %p205
      %p208 = scmp.ne.s32.totalorder %s191, %s207
      %p209 = scmp.eq.s32.totalorder %s26, 0
      %p210 = por %p208, %p209
      %s211 = ssub.s32 %s27, %s39
      %s212 = ssub.s32 %s28, %s35
      %s213 = sor.u32 %s211, %s212
      %p214 = scmp.eq.s32.totalorder %s213, 0
      %s216 = sadd.s32 %s215, 1
      %s217 = scalar_select %p214, %s215, %s216
      %p220 = pneg %p214
      %p221 = scmp.eq.s32.totalorder %s20, 1
      %p222 = por %p220, %p221
      %p223 = scmp.ne.s32.totalorder %s215, %s218
      %p224 = scmp.eq.s32.totalorder %s20, 0
      %p225 = por %p223, %p224
      %p226 = scmp.ne.s32.totalorder %s215, %s218
      %p227 = scmp.eq.s32.totalorder %s25, 1
      %p228 = por %p226, %p227
      %p229 = scmp.ne.s32.totalorder %s218, %s219
      %p230 = scmp.eq.s32.totalorder %s25, 0
      %p231 = por %p229, %p230
      %p232 = scmp.ne.s32.totalorder %s218, %s219
      %p233 = scmp.eq.s32.totalorder %s26, 1
      %p234 = por %p232, %p233
      %p236 = scmp.ne.s32.totalorder %s219, %s235
      %p237 = scmp.eq.s32.totalorder %s26, 0
      %p238 = por %p236, %p237
      %p239 = scmp.le.s32.totalorder 1, %s20
      %p240 = scmp.lt.s32.totalorder %s20, 3
      %p241 = pnand %p239, %p240
      %p242 = pneg %p241
      // Predicated region
      $region9: #{tpu_custom_call.1} parent=5 // pred_check
        _
      $region10: #{tpu_custom_call.1} parent=5 // pred_check_branch
        %244 = sbr.rel (%p241) target = $region12
      $region11: #{tpu_custom_call.1} parent=5 // pred_region
        %s245 = ssub.s32 %s20, 1
        // Predicated region
        $region13: #{tpu_custom_call.1} parent=11 // pred_check
          %p246 = pneg %p133
        $region14: #{tpu_custom_call.1} parent=11 // pred_check_branch
          %248 = sbr.rel (%p246) target = $region16
        $region15: #{tpu_custom_call.1} parent=11 // pred_region
          _
        $region16: #{tpu_custom_call.1} parent=11 // pred_fallthru
          _
        // Predicated region
        $region17: #{tpu_custom_call.1} parent=11 // pred_check
          %p249 = pneg %p154
        $region18: #{tpu_custom_call.1} parent=11 // pred_check_branch
          %251 = sbr.rel (%p249) target = $region20
        $region19: #{tpu_custom_call.1} parent=11 // pred_region
          _
        $region20: #{tpu_custom_call.1} parent=11 // pred_fallthru
          _
        // Predicated region
        $region21: #{tpu_custom_call.1} parent=11 // pred_check
          %p252 = pneg %p175
        $region22: #{tpu_custom_call.1} parent=11 // pred_check_branch
          %254 = sbr.rel (%p252) target = $region24
        $region23: #{tpu_custom_call.1} parent=11 // pred_region
          _
        $region24: #{tpu_custom_call.1} parent=11 // pred_fallthru
          _
      $region12: #{tpu_custom_call.1} parent=5 // pred_fallthru
        _
      %p255 = scmp.lt.s32.totalorder %s20, 2
      // Predicated region
      $region25: #{tpu_custom_call.1} parent=5 // pred_check
        %p256 = pneg %p255
      $region26: #{tpu_custom_call.1} parent=5 // pred_check_branch
        %258 = sbr.rel (%p256) target = $region28
      $region27: #{tpu_custom_call.1} parent=5 // pred_region
        // Predicated region
        $region29: #{tpu_custom_call.1} parent=27 // pred_check
          %p259 = pneg %p54
        $region30: #{tpu_custom_call.1} parent=27 // pred_check_branch
          %261 = sbr.rel (%p259) target = $region32
        $region31: #{tpu_custom_call.1} parent=27 // pred_region
          %p262 = scmp.lt.s32.totalorder %s27, 1
          %s263 = scalar_select %p262, %s27, 1
          %p264 = scmp.lt.s32.totalorder %s28, 0
          %s265 = scalar_select %p264, %s28, 0
          %s266 = sadd.s32 %s265, %s263
          %s267 = smul.addr %s266, 8
          %s268 = scalar_lea.vmem %s0, %s267
        $region32: #{tpu_custom_call.1} parent=27 // pred_fallthru
          _
        // Predicated region
        $region33: #{tpu_custom_call.1} parent=27 // pred_check
          %p269 = pneg %p80
        $region34: #{tpu_custom_call.1} parent=27 // pred_check_branch
          %271 = sbr.rel (%p269) target = $region36
        $region35: #{tpu_custom_call.1} parent=27 // pred_region
          %p272 = scmp.lt.s32.totalorder %s27, 1
          %s273 = scalar_select %p272, %s27, 1
          %s274 = smul.addr %s273, 4
          %s275 = smul.addr %s274, 8
          %s276 = scalar_lea.vmem %s1, %s275
        $region36: #{tpu_custom_call.1} parent=27 // pred_fallthru
          _
        // Predicated region
        $region37: #{tpu_custom_call.1} parent=27 // pred_check
          %p277 = pneg %p106
        $region38: #{tpu_custom_call.1} parent=27 // pred_check_branch
          %279 = sbr.rel (%p277) target = $region40
        $region39: #{tpu_custom_call.1} parent=27 // pred_region
          %p280 = scmp.lt.s32.totalorder %s27, 1
          %s281 = scalar_select %p280, %s27, 1
          %s282 = smul.addr %s281, 8
          %s283 = scalar_lea.vmem %s2, %s282
        $region40: #{tpu_custom_call.1} parent=27 // pred_fallthru
          _
      $region28: #{tpu_custom_call.1} parent=5 // pred_fallthru
        _
      %p284 = scmp.le.s32.totalorder 1, %s20
      %p285 = scmp.lt.s32.totalorder %s20, 3
      %p286 = pnand %p284, %p285
      %p287 = pneg %p286
      // Predicated region
      $region41: #{tpu_custom_call.1} parent=5 // pred_check
        _
      $region42: #{tpu_custom_call.1} parent=5 // pred_check_branch
        %289 = sbr.rel (%p286) target = $region44
      $region43: #{tpu_custom_call.1} parent=5 // pred_region
        %s290 = ssub.s32 %s20, 1
        %p291 = scmp.lt.s32.totalorder %s29, 1
        %s292 = scalar_select %p291, %s29, 1
        %p293 = scmp.lt.s32.totalorder %s30, 0
        %s294 = scalar_select %p293, %s30, 0
        %s295 = sadd.s32 %s294, %s292
        %s296 = smul.addr %s295, 8
        %s297 = scalar_lea.vmem %s0, %s296
        %p298 = pneg %p60
        %p299 = pneg %p57
        %p300 = scmp.lt.s32.totalorder %s29, 1
        %s301 = scalar_select %p300, %s29, 1
        %s302 = smul.addr %s301, 4
        %s303 = smul.addr %s302, 8
        %s304 = scalar_lea.vmem %s1, %s303
        %p305 = pneg %p86
        %p306 = pneg %p83
        %p307 = scmp.lt.s32.totalorder %s29, 1
        %s308 = scalar_select %p307, %s29, 1
        %s309 = smul.addr %s308, 8
        %s310 = scalar_lea.vmem %s2, %s309
        %p311 = pneg %p112
        %p312 = pneg %p109
        %p313 = pneg %p133
        %p314 = pneg %p130
        %p315 = pneg %p154
        %p316 = pneg %p151
        %p317 = pneg %p175
        %p318 = pneg %p172
        %p319 = pneg %p203
        %p320 = pneg %p200
        %s321 = sand.u32 %s190, 1
        %s322 = scalar_lea.sflag [#allocation3], %s321
        %s323 = sand.u32 %s190, 1
        %s324 = smul.addr %s323, 8
        %s325 = scalar_lea.vmem [#allocation2], %s324
        %p326 = pneg %p231
        %p327 = pneg %p228
        %s328 = sand.u32 %s218, 1
        %s329 = scalar_lea.sflag [#allocation5], %s328
        %s330 = sand.u32 %s218, 1
        %s331 = smul.addr %s330, 8
        %s332 = scalar_lea.vmem [#allocation4], %s331
        %p333 = scmp.lt.s32.totalorder %s29, 1
        %s334 = scalar_select %p333, %s29, 1
        %p335 = scmp.lt.s32.totalorder %s30, 0
        %s336 = scalar_select %p335, %s30, 0
        %s337 = sadd.s32 %s336, %s334
        %s338 = smul.addr %s337, 8
        %s339 = scalar_lea.vmem %s0, %s338
        %p340 = scmp.lt.s32.totalorder %s29, 1
        %s341 = scalar_select %p340, %s29, 1
        %s342 = smul.addr %s341, 4
        %s343 = smul.addr %s342, 8
        %s344 = scalar_lea.vmem %s1, %s343
        %p345 = scmp.lt.s32.totalorder %s29, 1
        %s346 = scalar_select %p345, %s29, 1
        %s347 = smul.addr %s346, 8
        %s348 = scalar_lea.vmem %s2, %s347
        %v349 = vld [vmem:[%s339] sm:$0xff]
        %v350 = vld [vmem:[%s3] sm:$0xff]
        %v351 = vld [vmem:[%s3 + $0x8] sm:$0xff]
        %v352 = vld [vmem:[%s3 + $0x10] sm:$0xff]
        %v353 = vld [vmem:[%s3 + $0x18] sm:$0xff]
        %v354 = vld [vmem:[%s4] sm:$0x1]
        %v356 = vlaneseq
        %v357 = vshrl.u32 %v356, 7
        %v358 = vsub.s32 0, %v357
        %v359 = vrot.slane %v354, %v358
        %vm361 = vcmask 261120
        %v363 = vsel %vm361, %v349, 0
        %365 = vmatprep.subr.mxu0 0.0
        %366 = vmatpush1.msra.mxu0 %v350
        %367 = vmatprep.subr.mxu0 0.0
        %368 = vmatpush1.msra.mxu0 %v351
        %369 = vmatprep.subr.mxu0 0.0
        %370 = vmatpush1.msra.mxu0 %v352
        %371 = vmatprep.subr.mxu0 0.0
        %372 = vmatpush1.msra.mxu0 %v353
        %373 = vmatprep.subr.mxu0 0.0
        %374 = vmatpush1.msra.mxu0 0.0
        %375 = vmatprep.subr.mxu0 0.0
        %376 = vmatpush1.msra.mxu0 0.0
        %377 = vmatprep.subr.mxu0 0.0
        %378 = vmatpush1.msra.mxu0 0.0
        %379 = vmatprep.subr.mxu0 0.0
        %380 = vmatpush1.msra.mxu0 0.0
        %381 = vmatprep.subr.mxu0 0.0
        %382 = vmatpush1.msra.mxu0 0.0
        %383 = vmatprep.subr.mxu0 0.0
        %384 = vmatpush1.msra.mxu0 0.0
        %385 = vmatprep.subr.mxu0 0.0
        %386 = vmatpush1.msra.mxu0 0.0
        %387 = vmatprep.subr.mxu0 0.0
        %388 = vmatpush1.msra.mxu0 0.0
        %389 = vmatprep.subr.mxu0 0.0
        %390 = vmatpush1.msra.mxu0 0.0
        %391 = vmatprep.subr.mxu0 0.0
        %392 = vmatpush1.msra.mxu0 0.0
        %393 = vmatprep.subr.mxu0 0.0
        %394 = vmatpush1.msra.mxu0 0.0
        %395 = vmatprep.subr.mxu0 0.0
        %396 = vmatpush1.msra.mxu0 0.0
        %397 = vmatprep.subr.mxu0 0.0
        %398 = vmatpush1.msra.mxu0 0.0
        %399 = vmatprep.subr.mxu0 0.0
        %400 = vmatpush1.msra.mxu0 0.0
        %401 = vmatprep.subr.mxu0 0.0
        %402 = vmatpush1.msra.mxu0 0.0
        %403 = vmatprep.subr.mxu0 0.0
        %404 = vmatpush1.msra.mxu0 0.0
        %405 = vmatprep.subr.mxu0 0.0
        %406 = vmatpush1.msra.mxu0 0.0
        %407 = vmatprep.subr.mxu0 0.0
        %408 = vmatpush1.msra.mxu0 0.0
        %409 = vmatprep.subr.mxu0 0.0
        %410 = vmatpush1.msra.mxu0 0.0
        %411 = vmatprep.subr.mxu0 0.0
        %412 = vmatpush1.msra.mxu0 0.0
        %413 = vmatprep.subr.mxu0 0.0
        %414 = vmatpush1.msra.mxu0 0.0
        %415 = vmatprep.subr.mxu0 0.0
        %416 = vmatpush1.msra.mxu0 0.0
        %417 = vmatprep.subr.mxu0 0.0
        %418 = vmatpush1.msra.mxu0 0.0
        %419 = vmatprep.subr.mxu0 0.0
        %420 = vmatpush1.msra.mxu0 0.0
        %421 = vmatprep.subr.mxu0 0.0
        %422 = vmatpush1.msra.mxu0 0.0
        %423 = vmatprep.subr.mxu0 0.0
        %424 = vmatpush1.msra.mxu0 0.0
        %425 = vmatprep.subr.mxu0 0.0
        %426 = vmatpush1.msra.mxu0 0.0
        %427 = vmatprep.subr.mxu0 0.0
        %428 = vmatpush1.msra.mxu0 0.0
        %429 = vmatprep.mubr.f32.mxu0 0.0
        %430 = vmatmul.mubr.f32.gmra.mrb[0].mxu0 %v363
        %v431 = vpop.f32.mrb[0].mxu0
        %v432 = vadd.f32 %v359, %v431
        %v433 = vpop.f32.mrb[0].mxu0
        %434 = vdwg.mxu0
        %v435 = vld [vmem:[%s344] sm:$0xff]
        %v436 = vld [vmem:[%s344 + $0x8] sm:$0xff]
        %v437 = vld [vmem:[%s344 + $0x10] sm:$0xff]
        %v438 = vld [vmem:[%s344 + $0x18] sm:$0xff]
        %v439 = vld [vmem:[%s5] sm:$0x1]
        %441 = vset.pattern.permute.xlu0 0
        %442 = vperm.xlu0 %441, %v432
        %v443 = vpop.permute.xlu0 %442
        %v445 = vlaneseq
        %v446 = vshrl.u32 %v445, 7
        %v447 = vsub.s32 0, %v446
        %v448 = vrot.slane %v435, %v447
        %v449 = vadd.f32 %v443, %v448
        %v450 = vtanh.pop %v449
        %v452 = vlaneseq
        %v453 = vshrl.u32 %v452, 7
        %v454 = vsub.s32 0, %v453
        %v455 = vrot.slane %v439, %v454
        %456 = vset.pattern.permute.xlu0 0
        %457 = vperm.xlu0 %456, %v455
        %v458 = vpop.permute.xlu0 %457
        %v460 = vmul.f32 %v458, %v450
        %v461 = vadd.f32 %v460, 0.0
        %462 = vset.pattern.permute.xlu0 1
        %463 = vperm.xlu0 %462, %v432
        %v464 = vpop.permute.xlu0 %463
        %v466 = vlaneseq
        %v467 = vshrl.u32 %v466, 7
        %v468 = vsub.s32 1, %v467
        %v469 = vrot.slane %v435, %v468
        %v470 = vadd.f32 %v464, %v469
        %v471 = vtanh.pop %v470
        %472 = vset.pattern.permute.xlu0 1
        %473 = vperm.xlu0 %472, %v455
        %v474 = vpop.permute.xlu0 %473
        %v476 = vmul.f32 %v474, %v471
        %v477 = vadd.f32 %v461, %v476
        %478 = vset.pattern.permute.xlu0 2
        %479 = vperm.xlu0 %478, %v432
        %v480 = vpop.permute.xlu0 %479
        %v482 = vlaneseq
        %v483 = vshrl.u32 %v482, 7
        %v484 = vsub.s32 2, %v483
        %v485 = vrot.slane %v435, %v484
        %v486 = vadd.f32 %v480, %v485
        %v487 = vtanh.pop %v486
        %488 = vset.pattern.permute.xlu0 2
        %489 = vperm.xlu0 %488, %v455
        %v490 = vpop.permute.xlu0 %489
        %v492 = vmul.f32 %v490, %v487
        %v493 = vadd.f32 %v477, %v492
        %494 = vset.pattern.permute.xlu0 3
        %495 = vperm.xlu0 %494, %v432
        %v496 = vpop.permute.xlu0 %495
        %v498 = vlaneseq
        %v499 = vshrl.u32 %v498, 7
        %v500 = vsub.s32 3, %v499
        %v501 = vrot.slane %v435, %v500
        %v502 = vadd.f32 %v496, %v501
        %v503 = vtanh.pop %v502
        %504 = vset.pattern.permute.xlu0 3
        %505 = vperm.xlu0 %504, %v455
        %v506 = vpop.permute.xlu0 %505
        %v508 = vmul.f32 %v506, %v503
        %v509 = vadd.f32 %v493, %v508
        %510 = vset.pattern.permute.xlu0 4
        %511 = vperm.xlu0 %510, %v432
        %v512 = vpop.permute.xlu0 %511
        %v514 = vlaneseq
        %v515 = vshrl.u32 %v514, 7
        %v516 = vsub.s32 4, %v515
        %v517 = vrot.slane %v435, %v516
        %v518 = vadd.f32 %v512, %v517
        %v519 = vtanh.pop %v518
        %520 = vset.pattern.permute.xlu0 4
        %521 = vperm.xlu0 %520, %v455
        %v522 = vpop.permute.xlu0 %521
        %v524 = vmul.f32 %v522, %v519
        %v525 = vadd.f32 %v509, %v524
        %526 = vset.pattern.permute.xlu0 5
        %527 = vperm.xlu0 %526, %v432
        %v528 = vpop.permute.xlu0 %527
        %v530 = vlaneseq
        %v531 = vshrl.u32 %v530, 7
        %v532 = vsub.s32 5, %v531
        %v533 = vrot.slane %v435, %v532
        %v534 = vadd.f32 %v528, %v533
        %v535 = vtanh.pop %v534
        %536 = vset.pattern.permute.xlu0 5
        %537 = vperm.xlu0 %536, %v455
        %v538 = vpop.permute.xlu0 %537
        %v540 = vmul.f32 %v538, %v535
        %v541 = vadd.f32 %v525, %v540
        %542 = vset.pattern.permute.xlu0 6
        %543 = vperm.xlu0 %542, %v432
        %v544 = vpop.permute.xlu0 %543
        %v546 = vlaneseq
        %v547 = vshrl.u32 %v546, 7
        %v548 = vsub.s32 6, %v547
        %v549 = vrot.slane %v435, %v548
        %v550 = vadd.f32 %v544, %v549
        %v551 = vtanh.pop %v550
        %552 = vset.pattern.permute.xlu0 6
        %553 = vperm.xlu0 %552, %v455
        %v554 = vpop.permute.xlu0 %553
        %v556 = vmul.f32 %v554, %v551
        %v557 = vadd.f32 %v541, %v556
        %558 = vset.pattern.permute.xlu0 7
        %559 = vperm.xlu0 %558, %v432
        %v560 = vpop.permute.xlu0 %559
        %v562 = vlaneseq
        %v563 = vshrl.u32 %v562, 7
        %v564 = vsub.s32 7, %v563
        %v565 = vrot.slane %v435, %v564
        %v566 = vadd.f32 %v560, %v565
        %v567 = vtanh.pop %v566
        %568 = vset.pattern.permute.xlu0 7
        %569 = vperm.xlu0 %568, %v455
        %v570 = vpop.permute.xlu0 %569
        %v572 = vmul.f32 %v570, %v567
        %v573 = vadd.f32 %v557, %v572
        %574 = vset.pattern.permute.xlu0 8
        %575 = vperm.xlu0 %574, %v432
        %v576 = vpop.permute.xlu0 %575
        %v578 = vlaneseq
        %v579 = vshrl.u32 %v578, 7
        %v580 = vsub.s32 0, %v579
        %v581 = vrot.slane %v436, %v580
        %v582 = vadd.f32 %v576, %v581
        %v583 = vtanh.pop %v582
        %584 = vset.pattern.permute.xlu0 8
        %585 = vperm.xlu0 %584, %v455
        %v586 = vpop.permute.xlu0 %585
        %v588 = vmul.f32 %v586, %v583
        %v589 = vadd.f32 %v573, %v588
        %590 = vset.pattern.permute.xlu0 9
        %591 = vperm.xlu0 %590, %v432
        %v592 = vpop.permute.xlu0 %591
        %v594 = vlaneseq
        %v595 = vshrl.u32 %v594, 7
        %v596 = vsub.s32 1, %v595
        %v597 = vrot.slane %v436, %v596
        %v598 = vadd.f32 %v592, %v597
        %v599 = vtanh.pop %v598
        %600 = vset.pattern.permute.xlu0 9
        %601 = vperm.xlu0 %600, %v455
        %v602 = vpop.permute.xlu0 %601
        %v604 = vmul.f32 %v602, %v599
        %v605 = vadd.f32 %v589, %v604
        %606 = vset.pattern.permute.xlu0 10
        %607 = vperm.xlu0 %606, %v432
        %v608 = vpop.permute.xlu0 %607
        %v610 = vlaneseq
        %v611 = vshrl.u32 %v610, 7
        %v612 = vsub.s32 2, %v611
        %v613 = vrot.slane %v436, %v612
        %v614 = vadd.f32 %v608, %v613
        %v615 = vtanh.pop %v614
        %616 = vset.pattern.permute.xlu0 10
        %617 = vperm.xlu0 %616, %v455
        %v618 = vpop.permute.xlu0 %617
        %v620 = vmul.f32 %v618, %v615
        %v621 = vadd.f32 %v605, %v620
        %622 = vset.pattern.permute.xlu0 11
        %623 = vperm.xlu0 %622, %v432
        %v624 = vpop.permute.xlu0 %623
        %v626 = vlaneseq
        %v627 = vshrl.u32 %v626, 7
        %v628 = vsub.s32 3, %v627
        %v629 = vrot.slane %v436, %v628
        %v630 = vadd.f32 %v624, %v629
        %v631 = vtanh.pop %v630
        %632 = vset.pattern.permute.xlu0 11
        %633 = vperm.xlu0 %632, %v455
        %v634 = vpop.permute.xlu0 %633
        %v636 = vmul.f32 %v634, %v631
        %v637 = vadd.f32 %v621, %v636
        %638 = vset.pattern.permute.xlu0 12
        %639 = vperm.xlu0 %638, %v432
        %v640 = vpop.permute.xlu0 %639
        %v642 = vlaneseq
        %v643 = vshrl.u32 %v642, 7
        %v644 = vsub.s32 4, %v643
        %v645 = vrot.slane %v436, %v644
        %v646 = vadd.f32 %v640, %v645
        %v647 = vtanh.pop %v646
        %648 = vset.pattern.permute.xlu0 12
        %649 = vperm.xlu0 %648, %v455
        %v650 = vpop.permute.xlu0 %649
        %v652 = vmul.f32 %v650, %v647
        %v653 = vadd.f32 %v637, %v652
        %654 = vset.pattern.permute.xlu0 13
        %655 = vperm.xlu0 %654, %v432
        %v656 = vpop.permute.xlu0 %655
        %v658 = vlaneseq
        %v659 = vshrl.u32 %v658, 7
        %v660 = vsub.s32 5, %v659
        %v661 = vrot.slane %v436, %v660
        %v662 = vadd.f32 %v656, %v661
        %v663 = vtanh.pop %v662
        %664 = vset.pattern.permute.xlu0 13
        %665 = vperm.xlu0 %664, %v455
        %v666 = vpop.permute.xlu0 %665
        %v668 = vmul.f32 %v666, %v663
        %v669 = vadd.f32 %v653, %v668
        %670 = vset.pattern.permute.xlu0 14
        %671 = vperm.xlu0 %670, %v432
        %v672 = vpop.permute.xlu0 %671
        %v674 = vlaneseq
        %v675 = vshrl.u32 %v674, 7
        %v676 = vsub.s32 6, %v675
        %v677 = vrot.slane %v436, %v676
        %v678 = vadd.f32 %v672, %v677
        %v679 = vtanh.pop %v678
        %680 = vset.pattern.permute.xlu0 14
        %681 = vperm.xlu0 %680, %v455
        %v682 = vpop.permute.xlu0 %681
        %v684 = vmul.f32 %v682, %v679
        %v685 = vadd.f32 %v669, %v684
        %686 = vset.pattern.permute.xlu0 15
        %687 = vperm.xlu0 %686, %v432
        %v688 = vpop.permute.xlu0 %687
        %v690 = vlaneseq
        %v691 = vshrl.u32 %v690, 7
        %v692 = vsub.s32 7, %v691
        %v693 = vrot.slane %v436, %v692
        %v694 = vadd.f32 %v688, %v693
        %v695 = vtanh.pop %v694
        %696 = vset.pattern.permute.xlu0 15
        %697 = vperm.xlu0 %696, %v455
        %v698 = vpop.permute.xlu0 %697
        %v700 = vmul.f32 %v698, %v695
        %v701 = vadd.f32 %v685, %v700
        %702 = vset.pattern.permute.xlu0 16
        %703 = vperm.xlu0 %702, %v432
        %v704 = vpop.permute.xlu0 %703
        %v706 = vlaneseq
        %v707 = vshrl.u32 %v706, 7
        %v708 = vsub.s32 0, %v707
        %v709 = vrot.slane %v437, %v708
        %v710 = vadd.f32 %v704, %v709
        %v711 = vtanh.pop %v710
        %712 = vset.pattern.permute.xlu0 16
        %713 = vperm.xlu0 %712, %v455
        %v714 = vpop.permute.xlu0 %713
        %v716 = vmul.f32 %v714, %v711
        %v717 = vadd.f32 %v701, %v716
        %718 = vset.pattern.permute.xlu0 17
        %719 = vperm.xlu0 %718, %v432
        %v720 = vpop.permute.xlu0 %719
        %v722 = vlaneseq
        %v723 = vshrl.u32 %v722, 7
        %v724 = vsub.s32 1, %v723
        %v725 = vrot.slane %v437, %v724
        %v726 = vadd.f32 %v720, %v725
        %v727 = vtanh.pop %v726
        %728 = vset.pattern.permute.xlu0 17
        %729 = vperm.xlu0 %728, %v455
        %v730 = vpop.permute.xlu0 %729
        %v732 = vmul.f32 %v730, %v727
        %v733 = vadd.f32 %v717, %v732
        %734 = vset.pattern.permute.xlu0 18
        %735 = vperm.xlu0 %734, %v432
        %v736 = vpop.permute.xlu0 %735
        %v738 = vlaneseq
        %v739 = vshrl.u32 %v738, 7
        %v740 = vsub.s32 2, %v739
        %v741 = vrot.slane %v437, %v740
        %v742 = vadd.f32 %v736, %v741
        %v743 = vtanh.pop %v742
        %744 = vset.pattern.permute.xlu0 18
        %745 = vperm.xlu0 %744, %v455
        %v746 = vpop.permute.xlu0 %745
        %v748 = vmul.f32 %v746, %v743
        %v749 = vadd.f32 %v733, %v748
        %750 = vset.pattern.permute.xlu0 19
        %751 = vperm.xlu0 %750, %v432
        %v752 = vpop.permute.xlu0 %751
        %v754 = vlaneseq
        %v755 = vshrl.u32 %v754, 7
        %v756 = vsub.s32 3, %v755
        %v757 = vrot.slane %v437, %v756
        %v758 = vadd.f32 %v752, %v757
        %v759 = vtanh.pop %v758
        %760 = vset.pattern.permute.xlu0 19
        %761 = vperm.xlu0 %760, %v455
        %v762 = vpop.permute.xlu0 %761
        %v764 = vmul.f32 %v762, %v759
        %v765 = vadd.f32 %v749, %v764
        %766 = vset.pattern.permute.xlu0 20
        %767 = vperm.xlu0 %766, %v432
        %v768 = vpop.permute.xlu0 %767
        %v770 = vlaneseq
        %v771 = vshrl.u32 %v770, 7
        %v772 = vsub.s32 4, %v771
        %v773 = vrot.slane %v437, %v772
        %v774 = vadd.f32 %v768, %v773
        %v775 = vtanh.pop %v774
        %776 = vset.pattern.permute.xlu0 20
        %777 = vperm.xlu0 %776, %v455
        %v778 = vpop.permute.xlu0 %777
        %v780 = vmul.f32 %v778, %v775
        %v781 = vadd.f32 %v765, %v780
        %782 = vset.pattern.permute.xlu0 21
        %783 = vperm.xlu0 %782, %v432
        %v784 = vpop.permute.xlu0 %783
        %v786 = vlaneseq
        %v787 = vshrl.u32 %v786, 7
        %v788 = vsub.s32 5, %v787
        %v789 = vrot.slane %v437, %v788
        %v790 = vadd.f32 %v784, %v789
        %v791 = vtanh.pop %v790
        %792 = vset.pattern.permute.xlu0 21
        %793 = vperm.xlu0 %792, %v455
        %v794 = vpop.permute.xlu0 %793
        %v796 = vmul.f32 %v794, %v791
        %v797 = vadd.f32 %v781, %v796
        %798 = vset.pattern.permute.xlu0 22
        %799 = vperm.xlu0 %798, %v432
        %v800 = vpop.permute.xlu0 %799
        %v802 = vlaneseq
        %v803 = vshrl.u32 %v802, 7
        %v804 = vsub.s32 6, %v803
        %v805 = vrot.slane %v437, %v804
        %v806 = vadd.f32 %v800, %v805
        %v807 = vtanh.pop %v806
        %808 = vset.pattern.permute.xlu0 22
        %809 = vperm.xlu0 %808, %v455
        %v810 = vpop.permute.xlu0 %809
        %v812 = vmul.f32 %v810, %v807
        %v813 = vadd.f32 %v797, %v812
        %814 = vset.pattern.permute.xlu0 23
        %815 = vperm.xlu0 %814, %v432
        %v816 = vpop.permute.xlu0 %815
        %v818 = vlaneseq
        %v819 = vshrl.u32 %v818, 7
        %v820 = vsub.s32 7, %v819
        %v821 = vrot.slane %v437, %v820
        %v822 = vadd.f32 %v816, %v821
        %v823 = vtanh.pop %v822
        %824 = vset.pattern.permute.xlu0 23
        %825 = vperm.xlu0 %824, %v455
        %v826 = vpop.permute.xlu0 %825
        %v828 = vmul.f32 %v826, %v823
        %v829 = vadd.f32 %v813, %v828
        %830 = vset.pattern.permute.xlu0 24
        %831 = vperm.xlu0 %830, %v432
        %v832 = vpop.permute.xlu0 %831
        %v834 = vlaneseq
        %v835 = vshrl.u32 %v834, 7
        %v836 = vsub.s32 0, %v835
        %v837 = vrot.slane %v438, %v836
        %v838 = vadd.f32 %v832, %v837
        %v839 = vtanh.pop %v838
        %840 = vset.pattern.permute.xlu0 24
        %841 = vperm.xlu0 %840, %v455
        %v842 = vpop.permute.xlu0 %841
        %v844 = vmul.f32 %v842, %v839
        %v845 = vadd.f32 %v829, %v844
        %846 = vset.pattern.permute.xlu0 25
        %847 = vperm.xlu0 %846, %v432
        %v848 = vpop.permute.xlu0 %847
        %v850 = vlaneseq
        %v851 = vshrl.u32 %v850, 7
        %v852 = vsub.s32 1, %v851
        %v853 = vrot.slane %v438, %v852
        %v854 = vadd.f32 %v848, %v853
        %v855 = vtanh.pop %v854
        %856 = vset.pattern.permute.xlu0 25
        %857 = vperm.xlu0 %856, %v455
        %v858 = vpop.permute.xlu0 %857
        %v860 = vmul.f32 %v858, %v855
        %v861 = vadd.f32 %v845, %v860
        %862 = vset.pattern.permute.xlu0 26
        %863 = vperm.xlu0 %862, %v432
        %v864 = vpop.permute.xlu0 %863
        %v866 = vlaneseq
        %v867 = vshrl.u32 %v866, 7
        %v868 = vsub.s32 2, %v867
        %v869 = vrot.slane %v438, %v868
        %v870 = vadd.f32 %v864, %v869
        %v871 = vtanh.pop %v870
        %872 = vset.pattern.permute.xlu0 26
        %873 = vperm.xlu0 %872, %v455
        %v874 = vpop.permute.xlu0 %873
        %v876 = vmul.f32 %v874, %v871
        %v877 = vadd.f32 %v861, %v876
        %878 = vset.pattern.permute.xlu0 27
        %879 = vperm.xlu0 %878, %v432
        %v880 = vpop.permute.xlu0 %879
        %v882 = vlaneseq
        %v883 = vshrl.u32 %v882, 7
        %v884 = vsub.s32 3, %v883
        %v885 = vrot.slane %v438, %v884
        %v886 = vadd.f32 %v880, %v885
        %v887 = vtanh.pop %v886
        %888 = vset.pattern.permute.xlu0 27
        %889 = vperm.xlu0 %888, %v455
        %v890 = vpop.permute.xlu0 %889
        %v892 = vmul.f32 %v890, %v887
        %v893 = vadd.f32 %v877, %v892
        %894 = vset.pattern.permute.xlu0 28
        %895 = vperm.xlu0 %894, %v432
        %v896 = vpop.permute.xlu0 %895
        %v898 = vlaneseq
        %v899 = vshrl.u32 %v898, 7
        %v900 = vsub.s32 4, %v899
        %v901 = vrot.slane %v438, %v900
        %v902 = vadd.f32 %v896, %v901
        %v903 = vtanh.pop %v902
        %904 = vset.pattern.permute.xlu0 28
        %905 = vperm.xlu0 %904, %v455
        %v906 = vpop.permute.xlu0 %905
        %v908 = vmul.f32 %v906, %v903
        %v909 = vadd.f32 %v893, %v908
        %910 = vset.pattern.permute.xlu0 29
        %911 = vperm.xlu0 %910, %v432
        %v912 = vpop.permute.xlu0 %911
        %v914 = vlaneseq
        %v915 = vshrl.u32 %v914, 7
        %v916 = vsub.s32 5, %v915
        %v917 = vrot.slane %v438, %v916
        %v918 = vadd.f32 %v912, %v917
        %v919 = vtanh.pop %v918
        %920 = vset.pattern.permute.xlu0 29
        %921 = vperm.xlu0 %920, %v455
        %v922 = vpop.permute.xlu0 %921
        %v924 = vmul.f32 %v922, %v919
        %v925 = vadd.f32 %v909, %v924
        %926 = vset.pattern.permute.xlu0 30
        %927 = vperm.xlu0 %926, %v432
        %v928 = vpop.permute.xlu0 %927
        %v930 = vlaneseq
        %v931 = vshrl.u32 %v930, 7
        %v932 = vsub.s32 6, %v931
        %v933 = vrot.slane %v438, %v932
        %v934 = vadd.f32 %v928, %v933
        %v935 = vtanh.pop %v934
        %936 = vset.pattern.permute.xlu0 30
        %937 = vperm.xlu0 %936, %v455
        %v938 = vpop.permute.xlu0 %937
        %v940 = vmul.f32 %v938, %v935
        %v941 = vadd.f32 %v925, %v940
        %942 = vset.pattern.permute.xlu0 31
        %943 = vperm.xlu0 %942, %v432
        %v944 = vpop.permute.xlu0 %943
        %v946 = vlaneseq
        %v947 = vshrl.u32 %v946, 7
        %v948 = vsub.s32 7, %v947
        %v949 = vrot.slane %v438, %v948
        %v950 = vadd.f32 %v944, %v949
        %v951 = vtanh.pop %v950
        %952 = vset.pattern.permute.xlu0 31
        %953 = vperm.xlu0 %952, %v455
        %v954 = vpop.permute.xlu0 %953
        %v956 = vmul.f32 %v954, %v951
        %v957 = vadd.f32 %v941, %v956
        %vm958 = vcmask 64512
        %v959 = vsel %vm958, %v957, -inf
        %960 = vmax.xlane.f32.xlu0 %v959
        %v961 = vpop.xlane.xlu0 %960
        %v962 = vsub.f32 %v957, %v961
        %v963 = vmul.f32 %v962, 1.442695
        %v964 = vpow.pop %v963
        %v965 = vsel %vm958, %v964, 0.0
        %966 = vadd.xlane.f32.xlu0 %v965
        %v967 = vpop.xlane.xlu0 %966
        %v968 = vrcp.pop %v967
        %v969 = vmul.f32 %v964, %v968
        %970 = vst.msk [vmem:[%s332] sm:$0xff] %vm958, %v969
        %v971 = vld [vmem:[%s348] sm:$0xff]
        %v973 = vsel %vm958, %v969, 0
        %975 = vmatprep.subr.mxu0 0.0
        %976 = vmatpush1.msra.mxu0 %v971
        %977 = vmatprep.subr.mxu0 0.0
        %978 = vmatpush1.msra.mxu0 0.0
        %979 = vmatprep.subr.mxu0 0.0
        %980 = vmatpush1.msra.mxu0 0.0
        %981 = vmatprep.subr.mxu0 0.0
        %982 = vmatpush1.msra.mxu0 0.0
        %983 = vmatprep.subr.mxu0 0.0
        %984 = vmatpush1.msra.mxu0 0.0
        %985 = vmatprep.subr.mxu0 0.0
        %986 = vmatpush1.msra.mxu0 0.0
        %987 = vmatprep.subr.mxu0 0.0
        %988 = vmatpush1.msra.mxu0 0.0
        %989 = vmatprep.subr.mxu0 0.0
        %990 = vmatpush1.msra.mxu0 0.0
        %991 = vmatprep.subr.mxu0 0.0
        %992 = vmatpush1.msra.mxu0 0.0
        %993 = vmatprep.subr.mxu0 0.0
        %994 = vmatpush1.msra.mxu0 0.0
        %995 = vmatprep.subr.mxu0 0.0
        %996 = vmatpush1.msra.mxu0 0.0
        %997 = vmatprep.subr.mxu0 0.0
        %998 = vmatpush1.msra.mxu0 0.0
        %999 = vmatprep.subr.mxu0 0.0
        %1000 = vmatpush1.msra.mxu0 0.0
        %1001 = vmatprep.subr.mxu0 0.0
        %1002 = vmatpush1.msra.mxu0 0.0
        %1003 = vmatprep.subr.mxu0 0.0
        %1004 = vmatpush1.msra.mxu0 0.0
        %1005 = vmatprep.subr.mxu0 0.0
        %1006 = vmatpush1.msra.mxu0 0.0
        %1007 = vmatprep.subr.mxu0 0.0
        %1008 = vmatpush1.msra.mxu0 0.0
        %1009 = vmatprep.subr.mxu0 0.0
        %1010 = vmatpush1.msra.mxu0 0.0
        %1011 = vmatprep.subr.mxu0 0.0
        %1012 = vmatpush1.msra.mxu0 0.0
        %1013 = vmatprep.subr.mxu0 0.0
        %1014 = vmatpush1.msra.mxu0 0.0
        %1015 = vmatprep.subr.mxu0 0.0
        %1016 = vmatpush1.msra.mxu0 0.0
        %1017 = vmatprep.subr.mxu0 0.0
        %1018 = vmatpush1.msra.mxu0 0.0
        %1019 = vmatprep.subr.mxu0 0.0
        %1020 = vmatpush1.msra.mxu0 0.0
        %1021 = vmatprep.subr.mxu0 0.0
        %1022 = vmatpush1.msra.mxu0 0.0
        %1023 = vmatprep.subr.mxu0 0.0
        %1024 = vmatpush1.msra.mxu0 0.0
        %1025 = vmatprep.subr.mxu0 0.0
        %1026 = vmatpush1.msra.mxu0 0.0
        %1027 = vmatprep.subr.mxu0 0.0
        %1028 = vmatpush1.msra.mxu0 0.0
        %1029 = vmatprep.subr.mxu0 0.0
        %1030 = vmatpush1.msra.mxu0 0.0
        %1031 = vmatprep.subr.mxu0 0.0
        %1032 = vmatpush1.msra.mxu0 0.0
        %1033 = vmatprep.subr.mxu0 0.0
        %1034 = vmatpush1.msra.mxu0 0.0
        %1035 = vmatprep.subr.mxu0 0.0
        %1036 = vmatpush1.msra.mxu0 0.0
        %1037 = vmatprep.subr.mxu0 0.0
        %1038 = vmatpush1.msra.mxu0 0.0
        %1039 = vmatprep.mubr.f32.mxu0 0.0
        %1040 = vmatmul.mubr.f32.gmra.mrb[0].mxu0 %v973
        %v1041 = vpop.f32.mrb[0].mxu0
        %v1042 = vadd.f32 0.0, %v1041
        %v1043 = vpop.f32.mrb[0].mxu0
        %1044 = vdwg.mxu0
        %1045 = vst.msk [vmem:[%s325] sm:$0xff] %vm361, %v1042
        %s1046 = sand.u32 %s190, 1
        %s1047 = scalar_lea.sflag [#allocation3], %s1046
        %s1048 = sand.u32 %s190, 1
        %s1049 = smul.addr %s1048, 8
        %s1050 = scalar_lea.vmem [#allocation2], %s1049
        %s1051 = sand.u32 %s218, 1
        %s1052 = scalar_lea.sflag [#allocation5], %s1051
        %s1053 = sand.u32 %s218, 1
        %s1054 = smul.addr %s1053, 8
        %s1055 = scalar_lea.vmem [#allocation4], %s1054
        // Predicated region
        $region45: #{tpu_custom_call.1} parent=43 // pred_check
          %p1056 = pneg %p200
        $region46: #{tpu_custom_call.1} parent=43 // pred_check_branch
          %1058 = sbr.rel (%p1056) target = $region48
        $region47: #{tpu_custom_call.1} parent=43 // pred_region
          %s1060 = ssub.s32 128, 128
          %1061 = vsyncadd %s1047, %s1060
          %s1062 = sadd.s32 %s30, %s29
          %s1063 = smul.addr %s1062, 128
          %s1064 = scalar_lea.hbm %s6, %s1063
          %s1066 = sshll.u32 %s1050, 4
          %s1067 = int_to_ptr.vmem [resolvable:$true] %s1066
          %1069 = dma.vmem_to_hbm [thread:$0]  %s1067, 128, %s1064, %s1047
        $region48: #{tpu_custom_call.1} parent=43 // pred_fallthru
          _
        // Predicated region
        $region49: #{tpu_custom_call.1} parent=43 // pred_check
          %p1070 = pneg %p228
        $region50: #{tpu_custom_call.1} parent=43 // pred_check_branch
          %1072 = sbr.rel (%p1070) target = $region52
        $region51: #{tpu_custom_call.1} parent=43 // pred_region
          %s1074 = ssub.s32 128, 128
          %1075 = vsyncadd %s1052, %s1074
          %s1076 = sadd.s32 %s30, %s29
          %s1077 = smul.addr %s1076, 128
          %s1078 = scalar_lea.hbm %s7, %s1077
          %s1080 = sshll.u32 %s1055, 4
          %s1081 = int_to_ptr.vmem [resolvable:$true] %s1080
          %1083 = dma.vmem_to_hbm [thread:$0]  %s1081, 128, %s1078, %s1052
        $region52: #{tpu_custom_call.1} parent=43 // pred_fallthru
          _
      $region44: #{tpu_custom_call.1} parent=5 // pred_fallthru
        _
      %p1084 = scmp.le.s32.totalorder 2, %s20
      // Predicated region
      $region53: #{tpu_custom_call.1} parent=5 // pred_check
        %p1085 = pneg %p1084
      $region54: #{tpu_custom_call.1} parent=5 // pred_check_branch
        %1087 = sbr.rel (%p1085) target = $region56
      $region55: #{tpu_custom_call.1} parent=5 // pred_region
        %s1088 = ssub.s32 %s20, 2
        // Predicated region
        $region57: #{tpu_custom_call.1} parent=55 // pred_check
          %p1089 = pneg %p206
        $region58: #{tpu_custom_call.1} parent=55 // pred_check_branch
          %1091 = sbr.rel (%p1089) target = $region60
        $region59: #{tpu_custom_call.1} parent=55 // pred_region
          %s1092 = sand.u32 %s191, 1
          %s1093 = scalar_lea.sflag [#allocation3], %s1092
          %s1094 = sand.u32 %s191, 1
          %s1095 = smul.addr %s1094, 8
          %s1096 = scalar_lea.vmem [#allocation2], %s1095
          %1097 = dma.done %s1093, 128
        $region60: #{tpu_custom_call.1} parent=55 // pred_fallthru
          _
        // Predicated region
        $region61: #{tpu_custom_call.1} parent=55 // pred_check
          %p1098 = pneg %p234
        $region62: #{tpu_custom_call.1} parent=55 // pred_check_branch
          %1100 = sbr.rel (%p1098) target = $region64
        $region63: #{tpu_custom_call.1} parent=55 // pred_region
          %s1101 = sand.u32 %s219, 1
          %s1102 = scalar_lea.sflag [#allocation5], %s1101
          %s1103 = sand.u32 %s219, 1
          %s1104 = smul.addr %s1103, 8
          %s1105 = scalar_lea.vmem [#allocation4], %s1104
          %1106 = dma.done %s1102, 128
        $region64: #{tpu_custom_call.1} parent=55 // pred_fallthru
          _
      $region56: #{tpu_custom_call.1} parent=5 // pred_fallthru
        _
    $region6: #{tpu_custom_call.1} parent=1 // loop_footer
      %s24 = sadd.s32 1, %s20
    $region7: #{tpu_custom_call.1} parent=1 // loop_footer_branch
      %19 = sbr.rel target = $region3
    $region8: #{tpu_custom_call.1} parent=1 // loop_exit
      _
    %1107 = vsyncpa [#allocation3], 1
    %s1108 = scalar_lea.sflag [#allocation3], 1
    %1109 = vsyncpa %s1108, 1
    %1110 = vsyncpa [#allocation5], 1
    %s1111 = scalar_lea.sflag [#allocation5], 1
    %1112 = vsyncpa %s1111, 1

</llo_original>
